<compile_context>
chip_gen: v7x
topology: tpu7x:2x2x1
jax: 0.10.0
libtpu: 0.0.40
codegen_flags: <defaults>
</compile_context>

<pallas_src>
import functools

import jax
import jax.numpy as jnp
import numpy as np
from jax import lax
from jax.experimental import pallas as pl
from jax.experimental.pallas import tpu as pltpu

EPS = 1e-5


# ----------------------------- Pallas kernel -------------------------------


def _resnet_block_kernel(x_ref, m1_ref, m2_ref, csum_ref,
                         g1_ref, be1_ref, g2_ref, be2_ref,
                         out_ref, xp_ref, y1p_ref, *, inv_n):
    """Fused: reflect-pad -> conv3x3 -> BN -> ReLU -> reflect-pad -> conv3x3 -> BN -> +x."""
    H, L = x_ref.shape                  # (H, N*W*C): 128-lane-dense slab
    csum = csum_ref[...]                # (L, L) 0/1 channel reduce+broadcast

    def reflect_pad_h(dst_ref, rows):
        # rows: (H, L) value; pad rows are written from values (no read-back,
        # so all pad stores can issue back-to-back).
        dst_ref[1:H + 1, :] = rows                          # interior
        dst_ref[0:1, :] = rows[1:2, :]                      # h=-1 <- h=1
        dst_ref[H + 1:H + 2, :] = rows[H - 2:H - 1, :]      # h=H  <- h=H-2

    def conv3x3(src_ref, m_ref):
        # 3x3 conv = 3 accumulated lane-dense matmuls.  Width reflect-pad and
        # the per-batch block-diagonal are pre-folded into m_ref on the host,
        # so every operand window is a contiguous (H, L) slab.
        acc = jnp.zeros((H, L), jnp.float32)
        for kh in range(3):              # static unroll: 3 MXU pushes, K=L
            acc = acc + jnp.dot(src_ref[kh:kh + H, :], m_ref[kh],
                                preferred_element_type=jnp.float32)
        return acc

    def batchnorm(acc, g_ref, b_ref):
        # Training-mode BN, single pass over acc.  One matmul per statistic
        # reduces over (batch, width) lanes and broadcasts back to lanes.
        s1 = jnp.sum(acc, axis=0, keepdims=True)            # (1, L)
        s2 = jnp.sum(acc * acc, axis=0, keepdims=True)      # (1, L)
        mean = jnp.dot(s1, csum, preferred_element_type=jnp.float32) * inv_n
        ex2 = jnp.dot(s2, csum, preferred_element_type=jnp.float32) * inv_n
        var = ex2 - mean * mean                              # biased variance
        scale = g_ref[...] * lax.rsqrt(var + EPS)            # (1, L) lane-wise
        shift = b_ref[...] - mean * scale
        return acc * scale + shift                           # (H, L)

    x = x_ref[...]                                           # (H, L)

    # ---- stage 1: reflect-pad -> conv -> BN -> ReLU ------------------------
    reflect_pad_h(xp_ref, x)
    y1 = jnp.maximum(batchnorm(conv3x3(xp_ref, m1_ref), g1_ref, be1_ref), 0.0)

    # ---- stage 2: reflect-pad (y1 never touches HBM) -> conv -> BN ---------
    reflect_pad_h(y1p_ref, y1)
    y2 = batchnorm(conv3x3(y1p_ref, m2_ref), g2_ref, be2_ref)

    # ---- residual add, full 128-lane store ---------------------------------
    out_ref[...] = (x + y2).astype(out_ref.dtype)


# ------------------------------- JAX wrapper --------------------------------


def resnet_block_forward(x_nchw, params):
    """out = x + conv_block(x); conv_block = [reflpad,conv3x3,BN,ReLU]x2 (no 2nd ReLU)."""
    N, C, H, W = x_nchw.shape
    L = N * W * C
    assert L % 128 == 0, "batch is packed along lanes; slab must be 128-lane dense"
    assert H >= 2 and W >= 2, "reflect padding needs >=2 rows/cols"

    # Layout glue (forced by the module's NCHW interface): (N,C,H,W)->(H, N*W*C).
    # TODO(synk): chained ResnetBlocks should stay in this lane-dense layout
    # end-to-end and only transpose at model boundaries.
    x_lanes = jnp.transpose(x_nchw, (2, 0, 3, 1)).astype(jnp.float32).reshape(H, L)

    # Host-built 0/1 channel reduce+broadcast matrix (constant).
    lane_c = np.arange(L) % C
    csum = jnp.asarray((lane_c[:, None] == lane_c[None, :]).astype(np.float32))

    kernel = functools.partial(_resnet_block_kernel,
                               inv_n=1.0 / float(N * H * W))

    out2d = pl.pallas_call(
        kernel,
        out_shape=jax.ShapeDtypeStruct((H, L), jnp.float32),
        grid=(1,),
        in_specs=[
            pl.BlockSpec((H, L), lambda i: (0, 0)),          # x slab
            pl.BlockSpec((3, L, L), lambda i: (0, 0, 0)),    # banded weights 1
            pl.BlockSpec((3, L, L), lambda i: (0, 0, 0)),    # banded weights 2
            pl.BlockSpec((L, L), lambda i: (0, 0)),          # channel-sum matrix
            pl.BlockSpec((1, L), lambda i: (0, 0)),          # gamma1 (lane-tiled)
            pl.BlockSpec((1, L), lambda i: (0, 0)),          # beta1
            pl.BlockSpec((1, L), lambda i: (0, 0)),          # gamma2
            pl.BlockSpec((1, L), lambda i: (0, 0)),          # beta2
        ],
        out_specs=pl.BlockSpec((H, L), lambda i: (0, 0)),
        scratch_shapes=[pltpu.VMEM((H + 2, L), jnp.float32),   # height-padded x
                        pltpu.VMEM((H + 2, L), jnp.float32)],  # height-padded y1
        compiler_params=pltpu.CompilerParams(
            dimension_semantics=("arbitrary",)),
    )(x_lanes, params["m1"], params["m2"], csum,
      params["g1"], params["be1"], params["g2"], params["be2"])

    return jnp.transpose(out2d.reshape(H, N, W, C), (1, 3, 0, 2))


# ------------------------------ Parameter init ------------------------------


def _banded_conv_weights(w_oihw, width, n_batch):
    """OIHW (C,C,3,3) -> (3, N*W*C, N*W*C) banded row matrices, one per kh.

    Width reflect-padding is folded into the first/last band blocks, and the
    band is replicated block-diagonally over the batch (batches are packed
    along lanes), so the kernel's matmul operands need no width padding.
    """
    w = np.asarray(w_oihw, np.float32)
    c = w.shape[0]
    wc = width * c
    band = np.zeros((3, wc, wc), np.float32)
    for kh in range(3):
        for kw in range(3):
            blk = w[:, :, kh, kw].T                      # (ci, co)
            for wo in range(width):
                wp = wo + kw                             # padded width coord in [0, W+1]
                if wp == 0:
                    wi = 1                               # reflect: w=-1 <- w=1
                elif wp == width + 1:
                    wi = width - 2                       # reflect: w=W  <- w=W-2
                else:
                    wi = wp - 1
                band[kh, wi * c:(wi + 1) * c, wo * c:(wo + 1) * c] += blk
    m = np.zeros((3, n_batch * wc, n_batch * wc), np.float32)
    for n in range(n_batch):
        m[:, n * wc:(n + 1) * wc, n * wc:(n + 1) * wc] = band
    return jnp.asarray(m)


def make_params(key, dim, width, n_batch):
    """Deterministic synthetic parameters (PyTorch Conv2d weight layout OIHW)."""
    ks = jax.random.split(key, 8)
    w1 = 0.1 * jax.random.normal(ks[0], (dim, dim, 3, 3), jnp.float32)
    b1 = 0.1 * jax.random.normal(ks[1], (dim,), jnp.float32)
    g1 = 1.0 + 0.1 * jax.random.normal(ks[2], (dim,), jnp.float32)
    be1 = 0.1 * jax.random.normal(ks[3], (dim,), jnp.float32)
    w2 = 0.1 * jax.random.normal(ks[4], (dim, dim, 3, 3), jnp.float32)
    b2 = 0.1 * jax.random.normal(ks[5], (dim,), jnp.float32)
    g2 = 1.0 + 0.1 * jax.random.normal(ks[6], (dim,), jnp.float32)
    be2 = 0.1 * jax.random.normal(ks[7], (dim,), jnp.float32)

    reps = n_batch * width

    def lane_tile(v):
        # Tile the per-channel parameter to the (1, N*W*C) lane layout (host side).
        return jnp.tile(v, reps)[None, :]

    kernel_params = dict(
        # Conv biases omitted on purpose: training-mode BatchNorm subtracts the
        # batch mean, which cancels a per-channel pre-BN bias exactly.
        m1=_banded_conv_weights(w1, width, n_batch),
        m2=_banded_conv_weights(w2, width, n_batch),
        g1=lane_tile(g1), be1=lane_tile(be1),
        g2=lane_tile(g2), be2=lane_tile(be2),
    )
    ref_params = dict(w1=w1, b1=b1, g1=g1, be1=be1,
                      w2=w2, b2=b2, g2=g2, be2=be2)
    return kernel_params, ref_params


# ---------------------------- Pure-JAX reference -----------------------------


def ref_forward(x_nchw, p):
    def conv_bn(x, w, b, g, beta, relu):
        xp = jnp.pad(x, ((0, 0), (0, 0), (1, 1), (1, 1)), mode="reflect")
        y = lax.conv_general_dilated(
            xp, w, (1, 1), "VALID",
            dimension_numbers=("NCHW", "OIHW", "NCHW"))
        y = y + b[None, :, None, None]                 # bias kept in reference
        mean = jnp.mean(y, axis=(0, 2, 3), keepdims=True)
        var = jnp.mean((y - mean) ** 2, axis=(0, 2, 3), keepdims=True)
        y = (y - mean) * lax.rsqrt(var + EPS)
        y = y * g[None, :, None, None] + beta[None, :, None, None]
        return jnp.maximum(y, 0.0) if relu else y

    h = conv_bn(x_nchw, p["w1"], p["b1"], p["g1"], p["be1"], relu=True)
    h = conv_bn(h, p["w2"], p["b2"], p["g2"], p["be2"], relu=False)
    return x_nchw + h


# ----------------------------------- Main ------------------------------------

if __name__ == "__main__":
    N, C, H, W = 2, 4, 16, 16            # x: (2, 4, 16, 16) NCHW, dim=4
    key = jax.random.PRNGKey(0)
    kx, kp = jax.random.split(key)
    x = jax.random.normal(kx, (N, C, H, W), jnp.float32)
    kernel_params, ref_params = make_params(kp, C, W, N)

    out = jax.block_until_ready(resnet_block_forward(x, kernel_params))

    ref = ref_forward(x, ref_params)
    assert out.shape == (N, C, H, W) and out.dtype == jnp.float32
    err = jnp.max(jnp.abs(out - ref))
    assert jnp.allclose(out, ref, atol=1e-4, rtol=1e-4), f"max abs err = {err}"

    print("KERNEL_OK")
</pallas_src>

<mosaic_0001>
module attributes {stable_mosaic.version = 11 : i64} {
  func.func @_resnet_block_kernel(%arg0: i32, %arg1: memref<16x128xf32, #tpu.memory_space<vmem>>, %arg2: memref<3x128x128xf32, #tpu.memory_space<vmem>>, %arg3: memref<3x128x128xf32, #tpu.memory_space<vmem>>, %arg4: memref<128x128xf32, #tpu.memory_space<vmem>>, %arg5: memref<1x128xf32, #tpu.memory_space<vmem>>, %arg6: memref<1x128xf32, #tpu.memory_space<vmem>>, %arg7: memref<1x128xf32, #tpu.memory_space<vmem>>, %arg8: memref<1x128xf32, #tpu.memory_space<vmem>>, %arg9: memref<16x128xf32, #tpu.memory_space<vmem>>, %arg10: memref<18x128xf32, #tpu.memory_space<vmem>>, %arg11: memref<18x128xf32, #tpu.memory_space<vmem>>) attributes {dimension_semantics = [#tpu.dimension_semantics<arbitrary>], iteration_bounds = array<i64: 1>, scalar_prefetch = 0 : i64, scratch_operands = 2 : i64, tpu.core_type = #tpu.core_type<tc>, window_params = [{pipeline_mode = #tpu.pipeline_mode<synchronous>, transform_indices = @transform_0, window_bounds = array<i64: 16, 128>}, {pipeline_mode = #tpu.pipeline_mode<synchronous>, transform_indices = @transform_1, window_bounds = array<i64: 3, 128, 128>}, {pipeline_mode = #tpu.pipeline_mode<synchronous>, transform_indices = @transform_2, window_bounds = array<i64: 3, 128, 128>}, {pipeline_mode = #tpu.pipeline_mode<synchronous>, transform_indices = @transform_3, window_bounds = array<i64: 128, 128>}, {pipeline_mode = #tpu.pipeline_mode<synchronous>, transform_indices = @transform_4, window_bounds = array<i64: 1, 128>}, {pipeline_mode = #tpu.pipeline_mode<synchronous>, transform_indices = @transform_5, window_bounds = array<i64: 1, 128>}, {pipeline_mode = #tpu.pipeline_mode<synchronous>, transform_indices = @transform_6, window_bounds = array<i64: 1, 128>}, {pipeline_mode = #tpu.pipeline_mode<synchronous>, transform_indices = @transform_7, window_bounds = array<i64: 1, 128>}, {pipeline_mode = #tpu.pipeline_mode<synchronous>, transform_indices = @transform_8, window_bounds = array<i64: 16, 128>}]} {
    %c0 = arith.constant 0 : index
    %c0_0 = arith.constant 0 : index
    %0 = vector.load %arg4[%c0, %c0_0] : memref<128x128xf32, #tpu.memory_space<vmem>>, vector<128x128xf32>
    %c0_1 = arith.constant 0 : index
    %c0_2 = arith.constant 0 : index
    %1 = vector.load %arg1[%c0_1, %c0_2] : memref<16x128xf32, #tpu.memory_space<vmem>>, vector<16x128xf32>
    %c1 = arith.constant 1 : index
    %c0_3 = arith.constant 0 : index
    %2 = vector.load %arg10[%c1, %c0_3] : memref<18x128xf32, #tpu.memory_space<vmem>>, vector<16x128xf32>
    tpu.vector_store %arg10[%c1, %c0_3], %1 {strides = array<i32>} : memref<18x128xf32, #tpu.memory_space<vmem>>, vector<16x128xf32>,
    %3 = vector.extract_strided_slice %1 {offsets = [1, 0], sizes = [1, 128], strides = [1, 1]} : vector<16x128xf32> to vector<1x128xf32>
    %c0_4 = arith.constant 0 : index
    %c0_5 = arith.constant 0 : index
    %4 = vector.load %arg10[%c0_4, %c0_5] : memref<18x128xf32, #tpu.memory_space<vmem>>, vector<1x128xf32>
    tpu.vector_store %arg10[%c0_4, %c0_5], %3 {strides = array<i32>} : memref<18x128xf32, #tpu.memory_space<vmem>>, vector<1x128xf32>,
    %5 = vector.extract_strided_slice %1 {offsets = [14, 0], sizes = [1, 128], strides = [1, 1]} : vector<16x128xf32> to vector<1x128xf32>
    %c17 = arith.constant 17 : index
    %c0_6 = arith.constant 0 : index
    %6 = vector.load %arg10[%c17, %c0_6] : memref<18x128xf32, #tpu.memory_space<vmem>>, vector<1x128xf32>
    tpu.vector_store %arg10[%c17, %c0_6], %5 {strides = array<i32>} : memref<18x128xf32, #tpu.memory_space<vmem>>, vector<1x128xf32>,
    %cst = arith.constant 0.000000e+00 : f32
    %7 = vector.broadcast %cst : f32 to vector<16x128xf32>
    %c0_7 = arith.constant 0 : index
    %c0_8 = arith.constant 0 : index
    %8 = vector.load %arg10[%c0_7, %c0_8] : memref<18x128xf32, #tpu.memory_space<vmem>>, vector<16x128xf32>
    %c0_9 = arith.constant 0 : index
    %c0_10 = arith.constant 0 : index
    %c0_11 = arith.constant 0 : index
    %9 = vector.load %arg2[%c0_9, %c0_10, %c0_11] : memref<3x128x128xf32, #tpu.memory_space<vmem>>, vector<1x128x128xf32>
    %10 = vector.shape_cast %9 : vector<1x128x128xf32> to vector<128x128xf32>
    %cst_12 = arith.constant dense<0.000000e+00> : vector<16x128xf32>
    %11 = tpu.matmul %8, %10, %cst_12 {dimension_numbers = #tpu.dot_dimension_numbers<[1], [0], [0], [1], [0, 0, 1, 1], [], []>} : vector<16x128xf32>, vector<128x128xf32>, vector<16x128xf32> -> vector<16x128xf32>
    %12 = arith.addf %7, %11 : vector<16x128xf32>
    %c1_13 = arith.constant 1 : index
    %c0_14 = arith.constant 0 : index
    %13 = vector.load %arg10[%c1_13, %c0_14] : memref<18x128xf32, #tpu.memory_space<vmem>>, vector<16x128xf32>
    %c1_15 = arith.constant 1 : index
    %c0_16 = arith.constant 0 : index
    %c0_17 = arith.constant 0 : index
    %14 = vector.load %arg2[%c1_15, %c0_16, %c0_17] : memref<3x128x128xf32, #tpu.memory_space<vmem>>, vector<1x128x128xf32>
    %15 = vector.shape_cast %14 : vector<1x128x128xf32> to vector<128x128xf32>
    %cst_18 = arith.constant dense<0.000000e+00> : vector<16x128xf32>
    %16 = tpu.matmul %13, %15, %cst_18 {dimension_numbers = #tpu.dot_dimension_numbers<[1], [0], [0], [1], [0, 0, 1, 1], [], []>} : vector<16x128xf32>, vector<128x128xf32>, vector<16x128xf32> -> vector<16x128xf32>
    %17 = arith.addf %12, %16 : vector<16x128xf32>
    %c2 = arith.constant 2 : index
    %c0_19 = arith.constant 0 : index
    %18 = vector.load %arg10[%c2, %c0_19] : memref<18x128xf32, #tpu.memory_space<vmem>>, vector<16x128xf32>
    %c2_20 = arith.constant 2 : index
    %c0_21 = arith.constant 0 : index
    %c0_22 = arith.constant 0 : index
    %19 = vector.load %arg2[%c2_20, %c0_21, %c0_22] : memref<3x128x128xf32, #tpu.memory_space<vmem>>, vector<1x128x128xf32>
    %20 = vector.shape_cast %19 : vector<1x128x128xf32> to vector<128x128xf32>
    %cst_23 = arith.constant dense<0.000000e+00> : vector<16x128xf32>
    %21 = tpu.matmul %18, %20, %cst_23 {dimension_numbers = #tpu.dot_dimension_numbers<[1], [0], [0], [1], [0, 0, 1, 1], [], []>} : vector<16x128xf32>, vector<128x128xf32>, vector<16x128xf32> -> vector<16x128xf32>
    %22 = arith.addf %17, %21 : vector<16x128xf32>
    %cst_24 = arith.constant dense<0.000000e+00> : vector<128xf32>
    %23 = vector.multi_reduction <add>, %22, %cst_24 [0] : vector<16x128xf32> to vector<128xf32>
    %24 = vector.shape_cast %23 : vector<128xf32> to vector<1x128xf32>
    %25 = arith.mulf %22, %22 : vector<16x128xf32>
    %cst_25 = arith.constant dense<0.000000e+00> : vector<128xf32>
    %26 = vector.multi_reduction <add>, %25, %cst_25 [0] : vector<16x128xf32> to vector<128xf32>
    %27 = vector.shape_cast %26 : vector<128xf32> to vector<1x128xf32>
    %cst_26 = arith.constant dense<0.000000e+00> : vector<1x128xf32>
    %28 = tpu.matmul %24, %0, %cst_26 {dimension_numbers = #tpu.dot_dimension_numbers<[1], [0], [0], [1], [0, 0, 1, 1], [], []>} : vector<1x128xf32>, vector<128x128xf32>, vector<1x128xf32> -> vector<1x128xf32>
    %cst_27 = arith.constant 0.001953125 : f32
    %29 = vector.broadcast %cst_27 : f32 to vector<1x128xf32>
    %30 = arith.mulf %28, %29 : vector<1x128xf32>
    %cst_28 = arith.constant dense<0.000000e+00> : vector<1x128xf32>
    %31 = tpu.matmul %27, %0, %cst_28 {dimension_numbers = #tpu.dot_dimension_numbers<[1], [0], [0], [1], [0, 0, 1, 1], [], []>} : vector<1x128xf32>, vector<128x128xf32>, vector<1x128xf32> -> vector<1x128xf32>
    %cst_29 = arith.constant 0.001953125 : f32
    %32 = vector.broadcast %cst_29 : f32 to vector<1x128xf32>
    %33 = arith.mulf %31, %32 : vector<1x128xf32>
    %34 = arith.mulf %30, %30 : vector<1x128xf32>
    %35 = arith.subf %33, %34 : vector<1x128xf32>
    %c0_30 = arith.constant 0 : index
    %c0_31 = arith.constant 0 : index
    %36 = vector.load %arg5[%c0_30, %c0_31] : memref<1x128xf32, #tpu.memory_space<vmem>>, vector<1x128xf32>
    %cst_32 = arith.constant 9.99999974E-6 : f32
    %37 = vector.broadcast %cst_32 : f32 to vector<1x128xf32>
    %38 = arith.addf %35, %37 : vector<1x128xf32>
    %39 = math.rsqrt %38 : vector<1x128xf32>
    %40 = arith.mulf %36, %39 : vector<1x128xf32>
    %c0_33 = arith.constant 0 : index
    %c0_34 = arith.constant 0 : index
    %41 = vector.load %arg6[%c0_33, %c0_34] : memref<1x128xf32, #tpu.memory_space<vmem>>, vector<1x128xf32>
    %42 = arith.mulf %30, %40 : vector<1x128xf32>
    %43 = arith.subf %41, %42 : vector<1x128xf32>
    %44 = vector.broadcast %40 : vector<1x128xf32> to vector<16x128xf32>
    %45 = arith.mulf %22, %44 : vector<16x128xf32>
    %46 = vector.broadcast %43 : vector<1x128xf32> to vector<16x128xf32>
    %47 = arith.addf %45, %46 : vector<16x128xf32>
    %cst_35 = arith.constant 0.000000e+00 : f32
    %48 = vector.broadcast %cst_35 : f32 to vector<16x128xf32>
    %49 = arith.maximumf %47, %48 : vector<16x128xf32>
    %c1_36 = arith.constant 1 : index
    %c0_37 = arith.constant 0 : index
    %50 = vector.load %arg11[%c1_36, %c0_37] : memref<18x128xf32, #tpu.memory_space<vmem>>, vector<16x128xf32>
    tpu.vector_store %arg11[%c1_36, %c0_37], %49 {strides = array<i32>} : memref<18x128xf32, #tpu.memory_space<vmem>>, vector<16x128xf32>,
    %51 = vector.extract_strided_slice %49 {offsets = [1, 0], sizes = [1, 128], strides = [1, 1]} : vector<16x128xf32> to vector<1x128xf32>
    %c0_38 = arith.constant 0 : index
    %c0_39 = arith.constant 0 : index
    %52 = vector.load %arg11[%c0_38, %c0_39] : memref<18x128xf32, #tpu.memory_space<vmem>>, vector<1x128xf32>
    tpu.vector_store %arg11[%c0_38, %c0_39], %51 {strides = array<i32>} : memref<18x128xf32, #tpu.memory_space<vmem>>, vector<1x128xf32>,
    %53 = vector.extract_strided_slice %49 {offsets = [14, 0], sizes = [1, 128], strides = [1, 1]} : vector<16x128xf32> to vector<1x128xf32>
    %c17_40 = arith.constant 17 : index
    %c0_41 = arith.constant 0 : index
    %54 = vector.load %arg11[%c17_40, %c0_41] : memref<18x128xf32, #tpu.memory_space<vmem>>, vector<1x128xf32>
    tpu.vector_store %arg11[%c17_40, %c0_41], %53 {strides = array<i32>} : memref<18x128xf32, #tpu.memory_space<vmem>>, vector<1x128xf32>,
    %cst_42 = arith.constant 0.000000e+00 : f32
    %55 = vector.broadcast %cst_42 : f32 to vector<16x128xf32>
    %c0_43 = arith.constant 0 : index
    %c0_44 = arith.constant 0 : index
    %56 = vector.load %arg11[%c0_43, %c0_44] : memref<18x128xf32, #tpu.memory_space<vmem>>, vector<16x128xf32>
    %c0_45 = arith.constant 0 : index
    %c0_46 = arith.constant 0 : index
    %c0_47 = arith.constant 0 : index
    %57 = vector.load %arg3[%c0_45, %c0_46, %c0_47] : memref<3x128x128xf32, #tpu.memory_space<vmem>>, vector<1x128x128xf32>
    %58 = vector.shape_cast %57 : vector<1x128x128xf32> to vector<128x128xf32>
    %cst_48 = arith.constant dense<0.000000e+00> : vector<16x128xf32>
    %59 = tpu.matmul %56, %58, %cst_48 {dimension_numbers = #tpu.dot_dimension_numbers<[1], [0], [0], [1], [0, 0, 1, 1], [], []>} : vector<16x128xf32>, vector<128x128xf32>, vector<16x128xf32> -> vector<16x128xf32>
    %60 = arith.addf %55, %59 : vector<16x128xf32>
    %c1_49 = arith.constant 1 : index
    %c0_50 = arith.constant 0 : index
    %61 = vector.load %arg11[%c1_49, %c0_50] : memref<18x128xf32, #tpu.memory_space<vmem>>, vector<16x128xf32>
    %c1_51 = arith.constant 1 : index
    %c0_52 = arith.constant 0 : index
    %c0_53 = arith.constant 0 : index
    %62 = vector.load %arg3[%c1_51, %c0_52, %c0_53] : memref<3x128x128xf32, #tpu.memory_space<vmem>>, vector<1x128x128xf32>
    %63 = vector.shape_cast %62 : vector<1x128x128xf32> to vector<128x128xf32>
    %cst_54 = arith.constant dense<0.000000e+00> : vector<16x128xf32>
    %64 = tpu.matmul %61, %63, %cst_54 {dimension_numbers = #tpu.dot_dimension_numbers<[1], [0], [0], [1], [0, 0, 1, 1], [], []>} : vector<16x128xf32>, vector<128x128xf32>, vector<16x128xf32> -> vector<16x128xf32>
    %65 = arith.addf %60, %64 : vector<16x128xf32>
    %c2_55 = arith.constant 2 : index
    %c0_56 = arith.constant 0 : index
    %66 = vector.load %arg11[%c2_55, %c0_56] : memref<18x128xf32, #tpu.memory_space<vmem>>, vector<16x128xf32>
    %c2_57 = arith.constant 2 : index
    %c0_58 = arith.constant 0 : index
    %c0_59 = arith.constant 0 : index
    %67 = vector.load %arg3[%c2_57, %c0_58, %c0_59] : memref<3x128x128xf32, #tpu.memory_space<vmem>>, vector<1x128x128xf32>
    %68 = vector.shape_cast %67 : vector<1x128x128xf32> to vector<128x128xf32>
    %cst_60 = arith.constant dense<0.000000e+00> : vector<16x128xf32>
    %69 = tpu.matmul %66, %68, %cst_60 {dimension_numbers = #tpu.dot_dimension_numbers<[1], [0], [0], [1], [0, 0, 1, 1], [], []>} : vector<16x128xf32>, vector<128x128xf32>, vector<16x128xf32> -> vector<16x128xf32>
    %70 = arith.addf %65, %69 : vector<16x128xf32>
    %cst_61 = arith.constant dense<0.000000e+00> : vector<128xf32>
    %71 = vector.multi_reduction <add>, %70, %cst_61 [0] : vector<16x128xf32> to vector<128xf32>
    %72 = vector.shape_cast %71 : vector<128xf32> to vector<1x128xf32>
    %73 = arith.mulf %70, %70 : vector<16x128xf32>
    %cst_62 = arith.constant dense<0.000000e+00> : vector<128xf32>
    %74 = vector.multi_reduction <add>, %73, %cst_62 [0] : vector<16x128xf32> to vector<128xf32>
    %75 = vector.shape_cast %74 : vector<128xf32> to vector<1x128xf32>
    %cst_63 = arith.constant dense<0.000000e+00> : vector<1x128xf32>
    %76 = tpu.matmul %72, %0, %cst_63 {dimension_numbers = #tpu.dot_dimension_numbers<[1], [0], [0], [1], [0, 0, 1, 1], [], []>} : vector<1x128xf32>, vector<128x128xf32>, vector<1x128xf32> -> vector<1x128xf32>
    %cst_64 = arith.constant 0.001953125 : f32
    %77 = vector.broadcast %cst_64 : f32 to vector<1x128xf32>
    %78 = arith.mulf %76, %77 : vector<1x128xf32>
    %cst_65 = arith.constant dense<0.000000e+00> : vector<1x128xf32>
    %79 = tpu.matmul %75, %0, %cst_65 {dimension_numbers = #tpu.dot_dimension_numbers<[1], [0], [0], [1], [0, 0, 1, 1], [], []>} : vector<1x128xf32>, vector<128x128xf32>, vector<1x128xf32> -> vector<1x128xf32>
    %cst_66 = arith.constant 0.001953125 : f32
    %80 = vector.broadcast %cst_66 : f32 to vector<1x128xf32>
    %81 = arith.mulf %79, %80 : vector<1x128xf32>
    %82 = arith.mulf %78, %78 : vector<1x128xf32>
    %83 = arith.subf %81, %82 : vector<1x128xf32>
    %c0_67 = arith.constant 0 : index
    %c0_68 = arith.constant 0 : index
    %84 = vector.load %arg7[%c0_67, %c0_68] : memref<1x128xf32, #tpu.memory_space<vmem>>, vector<1x128xf32>
    %cst_69 = arith.constant 9.99999974E-6 : f32
    %85 = vector.broadcast %cst_69 : f32 to vector<1x128xf32>
    %86 = arith.addf %83, %85 : vector<1x128xf32>
    %87 = math.rsqrt %86 : vector<1x128xf32>
    %88 = arith.mulf %84, %87 : vector<1x128xf32>
    %c0_70 = arith.constant 0 : index
    %c0_71 = arith.constant 0 : index
    %89 = vector.load %arg8[%c0_70, %c0_71] : memref<1x128xf32, #tpu.memory_space<vmem>>, vector<1x128xf32>
    %90 = arith.mulf %78, %88 : vector<1x128xf32>
    %91 = arith.subf %89, %90 : vector<1x128xf32>
    %92 = vector.broadcast %88 : vector<1x128xf32> to vector<16x128xf32>
    %93 = arith.mulf %70, %92 : vector<16x128xf32>
    %94 = vector.broadcast %91 : vector<1x128xf32> to vector<16x128xf32>
    %95 = arith.addf %93, %94 : vector<16x128xf32>
    %96 = arith.addf %1, %95 : vector<16x128xf32>
    %c0_72 = arith.constant 0 : index
    %c0_73 = arith.constant 0 : index
    %97 = vector.load %arg9[%c0_72, %c0_73] : memref<16x128xf32, #tpu.memory_space<vmem>>, vector<16x128xf32>
    tpu.vector_store %arg9[%c0_72, %c0_73], %96 {strides = array<i32>} : memref<16x128xf32, #tpu.memory_space<vmem>>, vector<16x128xf32>,
    return
  }
  func.func @transform_0(%arg0: i32) -> (i32, i32) {
    %c0_i32 = arith.constant 0 : i32
    %c0_i32_0 = arith.constant 0 : i32
    %c0_i32_1 = arith.constant 0 : i32
    return %c0_i32, %c0_i32_0 : i32, i32
  }
  func.func @transform_1(%arg0: i32) -> (i32, i32, i32) {
    %c0_i32 = arith.constant 0 : i32
    %c0_i32_0 = arith.constant 0 : i32
    %c0_i32_1 = arith.constant 0 : i32
    %c0_i32_2 = arith.constant 0 : i32
    return %c0_i32, %c0_i32_0, %c0_i32_1 : i32, i32, i32
  }
  func.func @transform_2(%arg0: i32) -> (i32, i32, i32) {
    %c0_i32 = arith.constant 0 : i32
    %c0_i32_0 = arith.constant 0 : i32
    %c0_i32_1 = arith.constant 0 : i32
    %c0_i32_2 = arith.constant 0 : i32
    return %c0_i32, %c0_i32_0, %c0_i32_1 : i32, i32, i32
  }
  func.func @transform_3(%arg0: i32) -> (i32, i32) {
    %c0_i32 = arith.constant 0 : i32
    %c0_i32_0 = arith.constant 0 : i32
    %c0_i32_1 = arith.constant 0 : i32
    return %c0_i32, %c0_i32_0 : i32, i32
  }
  func.func @transform_4(%arg0: i32) -> (i32, i32) {
    %c0_i32 = arith.constant 0 : i32
    %c0_i32_0 = arith.constant 0 : i32
    %c0_i32_1 = arith.constant 0 : i32
    return %c0_i32, %c0_i32_0 : i32, i32
  }
  func.func @transform_5(%arg0: i32) -> (i32, i32) {
    %c0_i32 = arith.constant 0 : i32
    %c0_i32_0 = arith.constant 0 : i32
    %c0_i32_1 = arith.constant 0 : i32
    return %c0_i32, %c0_i32_0 : i32, i32
  }
  func.func @transform_6(%arg0: i32) -> (i32, i32) {
    %c0_i32 = arith.constant 0 : i32
    %c0_i32_0 = arith.constant 0 : i32
    %c0_i32_1 = arith.constant 0 : i32
    return %c0_i32, %c0_i32_0 : i32, i32
  }
  func.func @transform_7(%arg0: i32) -> (i32, i32) {
    %c0_i32 = arith.constant 0 : i32
    %c0_i32_0 = arith.constant 0 : i32
    %c0_i32_1 = arith.constant 0 : i32
    return %c0_i32, %c0_i32_0 : i32, i32
  }
  func.func @transform_8(%arg0: i32) -> (i32, i32) {
    %c0_i32 = arith.constant 0 : i32
    %c0_i32_0 = arith.constant 0 : i32
    %c0_i32_1 = arith.constant 0 : i32
    return %c0_i32, %c0_i32_0 : i32, i32
  }
}

</mosaic_0001>

<llo_original>
// kernel: tpu_custom_call.1
$region0: #{tpu_custom_call.1}
  #allocation0 [shape = 'u32[]', space=smem, size = 0x4, offset = 0x4, fixed_abs, tag = 'smem constant byte address 0x4 - core index']
  #allocation1 [shape = 'u32[144,128]{1,0:T(1,128)}', space=vmem, size = 0x12000, scoped, tag = 'internal scratch']
  #allocation2 [shape = 'f32[18,128]{1,0:T(8,128)}', space=vmem, size = 0x3000, scoped, tag = 'scratch operand']
  #allocation3 [shape = 'f32[18,128]{1,0:T(8,128)}', space=vmem, size = 0x3000, scoped, tag = 'scratch operand']
  %s0 = inlined_call_operand.hbm [shape: f32[16,128], index: 0, kind: input, shape index: {}]
  %s1 = inlined_call_operand.hbm [shape: f32[3,128,128], index: 1, kind: input, shape index: {}]
  %s2 = inlined_call_operand.hbm [shape: f32[3,128,128], index: 2, kind: input, shape index: {}]
  %s3 = inlined_call_operand.hbm [shape: f32[128,128], index: 3, kind: input, shape index: {}]
  %s4 = inlined_call_operand.vmem [shape: f32[1,128], index: 4, kind: input, shape index: {}]
  %s5 = inlined_call_operand.vmem [shape: f32[1,128], index: 5, kind: input, shape index: {}]
  %s6 = inlined_call_operand.vmem [shape: f32[1,128], index: 6, kind: input, shape index: {}]
  %s7 = inlined_call_operand.vmem [shape: f32[1,128], index: 7, kind: input, shape index: {}]
  %s8 = inlined_call_operand.hbm [shape: f32[16,128], index: 8, kind: output, shape index: {}]
  %s9 = sld [smem:[#allocation0]]
  $region58: #{tpu_custom_call.1} parent=0
    _
  %s11 = ssub.s32 1, %s9
  %s12 = scalar_select 0, %s11, %s9
  $region1: #{tpu_custom_call.1} parent=0
    #allocation4 [shape = 'u8[8192]{0}', space=vmem, size = 0x2000, scoped, tag = 'input window, operand 0, single buffered']
    #allocation5 [shape = 's32[1]{0}', space=sflag, size = 0x4, scoped, tag = 'scoped memory for tpu_custom_call.1']
    #allocation6 [shape = 's32[1]{0}', space=sflag, size = 0x4, scoped, tag = 'scoped memory for tpu_custom_call.1']
    #allocation7 [shape = 'u8[196608]{0}', space=vmem, size = 0x30000, scoped, tag = 'input window, operand 1, single buffered']
    #allocation8 [shape = 's32[1]{0}', space=sflag, size = 0x4, scoped, tag = 'scoped memory for tpu_custom_call.1']
    #allocation9 [shape = 'u8[196608]{0}', space=vmem, size = 0x30000, scoped, tag = 'input window, operand 2, single buffered']
    #allocation10 [shape = 'u8[65536]{0}', space=vmem, size = 0x10000, scoped, tag = 'input window, operand 3, single buffered']
    #allocation11 [shape = 's32[1]{0}', space=sflag, size = 0x4, scoped, tag = 'scoped memory for tpu_custom_call.1']
    #allocation12 [shape = 'u8[8192]{0}', space=vmem, size = 0x2000, scoped, tag = 'output window, operand 0, single buffered']
    %13 = vsyncpa [#allocation5], 0
    %14 = vsyncpa [#allocation8], 0
    %15 = vsyncpa [#allocation11], 0
    %16 = vsyncpa [#allocation6], 0
    // Predicated region
    $region2: #{tpu_custom_call.1} parent=1 // pred_check
      _
    $region3: #{tpu_custom_call.1} parent=1 // pred_check_branch
      %18 = sbr.rel (0) target = $region5
    $region4: #{tpu_custom_call.1} parent=1 // pred_region
      %s20 = ssub.s32 256, 256
      %21 = vsyncadd [#allocation5], %s20
      %s22 = sshll.u32 [#allocation4], 4
      %s23 = int_to_ptr.vmem [resolvable:$true] %s22
      %28 = dma.hbm_to_vmem [thread:$0]  %s0, 256, %s23, [#allocation5], 128, 128, 8
    $region5: #{tpu_custom_call.1} parent=1 // pred_fallthru
      _
    // Predicated region
    $region6: #{tpu_custom_call.1} parent=1 // pred_check
      _
    $region7: #{tpu_custom_call.1} parent=1 // pred_check_branch
      %30 = sbr.rel (0) target = $region9
    $region8: #{tpu_custom_call.1} parent=1 // pred_region
      %s32 = ssub.s32 6144, 6144
      %33 = vsyncadd [#allocation8], %s32
      %s34 = sshll.u32 [#allocation7], 4
      %s35 = int_to_ptr.vmem [resolvable:$true] %s34
      %40 = dma.hbm_to_vmem [thread:$0]  %s1, 6144, %s35, [#allocation8], 128, 128, 8
    $region9: #{tpu_custom_call.1} parent=1 // pred_fallthru
      _
    // Predicated region
    $region10: #{tpu_custom_call.1} parent=1 // pred_check
      _
    $region11: #{tpu_custom_call.1} parent=1 // pred_check_branch
      %42 = sbr.rel (0) target = $region13
    $region12: #{tpu_custom_call.1} parent=1 // pred_region
      %s44 = ssub.s32 6144, 6144
      %45 = vsyncadd [#allocation8], %s44
      %s46 = sshll.u32 [#allocation9], 4
      %s47 = int_to_ptr.vmem [resolvable:$true] %s46
      %52 = dma.hbm_to_vmem [thread:$0]  %s2, 6144, %s47, [#allocation8], 128, 128, 8
    $region13: #{tpu_custom_call.1} parent=1 // pred_fallthru
      _
    // Predicated region
    $region14: #{tpu_custom_call.1} parent=1 // pred_check
      _
    $region15: #{tpu_custom_call.1} parent=1 // pred_check_branch
      %54 = sbr.rel (0) target = $region17
    $region16: #{tpu_custom_call.1} parent=1 // pred_region
      %s56 = ssub.s32 2048, 2048
      %57 = vsyncadd [#allocation11], %s56
      %s58 = sshll.u32 [#allocation10], 4
      %s59 = int_to_ptr.vmem [resolvable:$true] %s58
      %64 = dma.hbm_to_vmem [thread:$0]  %s3, 2048, %s59, [#allocation11], 128, 128, 8
    $region17: #{tpu_custom_call.1} parent=1 // pred_fallthru
      _
    // Predicated region
    $region18: #{tpu_custom_call.1} parent=1 // pred_check
      _
    $region19: #{tpu_custom_call.1} parent=1 // pred_check_branch
      %66 = sbr.rel (0) target = $region21
    $region20: #{tpu_custom_call.1} parent=1 // pred_region
      _
    $region21: #{tpu_custom_call.1} parent=1 // pred_fallthru
      _
    // Predicated region
    $region22: #{tpu_custom_call.1} parent=1 // pred_check
      _
    $region23: #{tpu_custom_call.1} parent=1 // pred_check_branch
      %68 = sbr.rel (0) target = $region25
    $region24: #{tpu_custom_call.1} parent=1 // pred_region
      _
    $region25: #{tpu_custom_call.1} parent=1 // pred_fallthru
      _
    // Predicated region
    $region26: #{tpu_custom_call.1} parent=1 // pred_check
      _
    $region27: #{tpu_custom_call.1} parent=1 // pred_check_branch
      %70 = sbr.rel (0) target = $region29
    $region28: #{tpu_custom_call.1} parent=1 // pred_region
      _
    $region29: #{tpu_custom_call.1} parent=1 // pred_fallthru
      _
    // Predicated region
    $region30: #{tpu_custom_call.1} parent=1 // pred_check
      _
    $region31: #{tpu_custom_call.1} parent=1 // pred_check_branch
      %72 = sbr.rel (0) target = $region33
    $region32: #{tpu_custom_call.1} parent=1 // pred_region
      _
    $region33: #{tpu_custom_call.1} parent=1 // pred_fallthru
      _
    // Predicated region
    $region34: #{tpu_custom_call.1} parent=1 // pred_check
      _
    $region35: #{tpu_custom_call.1} parent=1 // pred_check_branch
      %74 = sbr.rel (0) target = $region37
    $region36: #{tpu_custom_call.1} parent=1 // pred_region
      %75 = dma.done [#allocation5], 256
    $region37: #{tpu_custom_call.1} parent=1 // pred_fallthru
      _
    // Predicated region
    $region38: #{tpu_custom_call.1} parent=1 // pred_check
      _
    $region39: #{tpu_custom_call.1} parent=1 // pred_check_branch
      %77 = sbr.rel (0) target = $region41
    $region40: #{tpu_custom_call.1} parent=1 // pred_region
      %78 = dma.done [#allocation8], 6144
    $region41: #{tpu_custom_call.1} parent=1 // pred_fallthru
      _
    // Predicated region
    $region42: #{tpu_custom_call.1} parent=1 // pred_check
      _
    $region43: #{tpu_custom_call.1} parent=1 // pred_check_branch
      %80 = sbr.rel (0) target = $region45
    $region44: #{tpu_custom_call.1} parent=1 // pred_region
      %81 = dma.done [#allocation8], 6144
    $region45: #{tpu_custom_call.1} parent=1 // pred_fallthru
      _
    // Predicated region
    $region46: #{tpu_custom_call.1} parent=1 // pred_check
      _
    $region47: #{tpu_custom_call.1} parent=1 // pred_check_branch
      %83 = sbr.rel (0) target = $region49
    $region48: #{tpu_custom_call.1} parent=1 // pred_region
      %84 = dma.done [#allocation11], 2048
    $region49: #{tpu_custom_call.1} parent=1 // pred_fallthru
      _
    %v85 = vld [vmem:[#allocation10] sm:$0xff]
    %v86 = vld [vmem:[#allocation10 + $0x8] sm:$0xff]
    %v87 = vld [vmem:[#allocation10 + $0x10] sm:$0xff]
    %v88 = vld [vmem:[#allocation10 + $0x18] sm:$0xff]
    %v89 = vld [vmem:[#allocation10 + $0x20] sm:$0xff]
    %v90 = vld [vmem:[#allocation10 + $0x28] sm:$0xff]
    %v91 = vld [vmem:[#allocation10 + $0x30] sm:$0xff]
    %v92 = vld [vmem:[#allocation10 + $0x38] sm:$0xff]
    %v93 = vld [vmem:[#allocation10 + $0x40] sm:$0xff]
    %v94 = vld [vmem:[#allocation10 + $0x48] sm:$0xff]
    %v95 = vld [vmem:[#allocation10 + $0x50] sm:$0xff]
    %v96 = vld [vmem:[#allocation10 + $0x58] sm:$0xff]
    %v97 = vld [vmem:[#allocation10 + $0x60] sm:$0xff]
    %v98 = vld [vmem:[#allocation10 + $0x68] sm:$0xff]
    %v99 = vld [vmem:[#allocation10 + $0x70] sm:$0xff]
    %v100 = vld [vmem:[#allocation10 + $0x78] sm:$0xff]
    %v101 = vld [vmem:[#allocation4] sm:$0xff]
    %v102 = vld [vmem:[#allocation4 + $0x8] sm:$0xff]
    %103 = vst [vmem:[#allocation2 + $0x1] sm:$0xff] %v101
    %104 = vst [vmem:[#allocation2 + $0x9] sm:$0xff] %v102
    %105 = vst [vmem:[#allocation2 - $0x1] sm:$0x2] %v101
    %106 = vst [vmem:[#allocation2 + $0xb] sm:$0x40] %v102
    %v107 = vld [vmem:[#allocation2] sm:$0xff]
    %v108 = vld [vmem:[#allocation2 + $0x8] sm:$0xff]
    %v109 = vld [vmem:[#allocation7] sm:$0xff]
    %v110 = vld [vmem:[#allocation7 + $0x8] sm:$0xff]
    %v111 = vld [vmem:[#allocation7 + $0x10] sm:$0xff]
    %v112 = vld [vmem:[#allocation7 + $0x18] sm:$0xff]
    %v113 = vld [vmem:[#allocation7 + $0x20] sm:$0xff]
    %v114 = vld [vmem:[#allocation7 + $0x28] sm:$0xff]
    %v115 = vld [vmem:[#allocation7 + $0x30] sm:$0xff]
    %v116 = vld [vmem:[#allocation7 + $0x38] sm:$0xff]
    %v117 = vld [vmem:[#allocation7 + $0x40] sm:$0xff]
    %v118 = vld [vmem:[#allocation7 + $0x48] sm:$0xff]
    %v119 = vld [vmem:[#allocation7 + $0x50] sm:$0xff]
    %v120 = vld [vmem:[#allocation7 + $0x58] sm:$0xff]
    %v121 = vld [vmem:[#allocation7 + $0x60] sm:$0xff]
    %v122 = vld [vmem:[#allocation7 + $0x68] sm:$0xff]
    %v123 = vld [vmem:[#allocation7 + $0x70] sm:$0xff]
    %v124 = vld [vmem:[#allocation7 + $0x78] sm:$0xff]
    %v125 = vld [vmem:[#allocation2 + $0x1] sm:$0xff]
    %v126 = vld [vmem:[#allocation2 + $0x9] sm:$0xff]
    %s127 = scalar_lea.vmem [#allocation7], 128
    %v128 = vld [vmem:[%s127] sm:$0xff]
    %v129 = vld [vmem:[%s127 + $0x8] sm:$0xff]
    %v130 = vld [vmem:[%s127 + $0x10] sm:$0xff]
    %v131 = vld [vmem:[%s127 + $0x18] sm:$0xff]
    %v132 = vld [vmem:[%s127 + $0x20] sm:$0xff]
    %v133 = vld [vmem:[%s127 + $0x28] sm:$0xff]
    %v134 = vld [vmem:[%s127 + $0x30] sm:$0xff]
    %v135 = vld [vmem:[%s127 + $0x38] sm:$0xff]
    %v136 = vld [vmem:[%s127 + $0x40] sm:$0xff]
    %v137 = vld [vmem:[%s127 + $0x48] sm:$0xff]
    %v138 = vld [vmem:[%s127 + $0x50] sm:$0xff]
    %v139 = vld [vmem:[%s127 + $0x58] sm:$0xff]
    %v140 = vld [vmem:[%s127 + $0x60] sm:$0xff]
    %v141 = vld [vmem:[%s127 + $0x68] sm:$0xff]
    %v142 = vld [vmem:[%s127 + $0x70] sm:$0xff]
    %v143 = vld [vmem:[%s127 + $0x78] sm:$0xff]
    %144 = vmatprep.subr.mxu0 0.0
    %145 = vmatpush1.msra.mxu0 %v128
    %146 = vmatprep.subr.mxu0 0.0
    %147 = vmatpush1.msra.mxu0 %v129
    %148 = vmatprep.subr.mxu0 0.0
    %149 = vmatpush1.msra.mxu0 %v130
    %150 = vmatprep.subr.mxu0 0.0
    %151 = vmatpush1.msra.mxu0 %v131
    %152 = vmatprep.subr.mxu0 0.0
    %153 = vmatpush1.msra.mxu0 %v132
    %154 = vmatprep.subr.mxu0 0.0
    %155 = vmatpush1.msra.mxu0 %v133
    %156 = vmatprep.subr.mxu0 0.0
    %157 = vmatpush1.msra.mxu0 %v134
    %158 = vmatprep.subr.mxu0 0.0
    %159 = vmatpush1.msra.mxu0 %v135
    %160 = vmatprep.subr.mxu0 0.0
    %161 = vmatpush1.msra.mxu0 %v136
    %162 = vmatprep.subr.mxu0 0.0
    %163 = vmatpush1.msra.mxu0 %v137
    %164 = vmatprep.subr.mxu0 0.0
    %165 = vmatpush1.msra.mxu0 %v138
    %166 = vmatprep.subr.mxu0 0.0
    %167 = vmatpush1.msra.mxu0 %v139
    %168 = vmatprep.subr.mxu0 0.0
    %169 = vmatpush1.msra.mxu0 %v140
    %170 = vmatprep.subr.mxu0 0.0
    %171 = vmatpush1.msra.mxu0 %v141
    %172 = vmatprep.subr.mxu0 0.0
    %173 = vmatpush1.msra.mxu0 %v142
    %174 = vmatprep.subr.mxu0 0.0
    %175 = vmatpush1.msra.mxu0 %v143
    %176 = vmatprep.subr.mxu0 0.0
    %177 = vmatpush1.msra.mxu0 0.0
    %178 = vmatprep.subr.mxu0 0.0
    %179 = vmatpush1.msra.mxu0 0.0
    %180 = vmatprep.subr.mxu0 0.0
    %181 = vmatpush1.msra.mxu0 0.0
    %182 = vmatprep.subr.mxu0 0.0
    %183 = vmatpush1.msra.mxu0 0.0
    %184 = vmatprep.subr.mxu0 0.0
    %185 = vmatpush1.msra.mxu0 0.0
    %186 = vmatprep.subr.mxu0 0.0
    %187 = vmatpush1.msra.mxu0 0.0
    %188 = vmatprep.subr.mxu0 0.0
    %189 = vmatpush1.msra.mxu0 0.0
    %190 = vmatprep.subr.mxu0 0.0
    %191 = vmatpush1.msra.mxu0 0.0
    %192 = vmatprep.subr.mxu0 0.0
    %193 = vmatpush1.msra.mxu0 0.0
    %194 = vmatprep.subr.mxu0 0.0
    %195 = vmatpush1.msra.mxu0 0.0
    %196 = vmatprep.subr.mxu0 0.0
    %197 = vmatpush1.msra.mxu0 0.0
    %198 = vmatprep.subr.mxu0 0.0
    %199 = vmatpush1.msra.mxu0 0.0
    %200 = vmatprep.subr.mxu0 0.0
    %201 = vmatpush1.msra.mxu0 0.0
    %202 = vmatprep.subr.mxu0 0.0
    %203 = vmatpush1.msra.mxu0 0.0
    %204 = vmatprep.subr.mxu0 0.0
    %205 = vmatpush1.msra.mxu0 0.0
    %206 = vmatprep.subr.mxu0 0.0
    %207 = vmatpush1.msra.mxu0 0.0
    %208 = vmatprep.mubr.f32.mxu0 0.0
    %209 = vmatmul.mubr.f32.gmra.mrb[0].mxu0 %v125
    %v210 = vpop.f32.mrb[0].mxu0
    %v211 = vadd.f32 0.0, %v210
    %v212 = vpop.f32.mrb[0].mxu0
    %213 = vmatprep.mubr.f32.mxu0 0.0
    %214 = vmatmul.mubr.f32.gmra.mrb[0].mxu0 %v126
    %v215 = vpop.f32.mrb[0].mxu0
    %v216 = vadd.f32 0.0, %v215
    %v217 = vpop.f32.mrb[0].mxu0
    %218 = vdwg.mxu0
    %219 = vmatprep.subr.mxu0 0.0
    %220 = vmatpush1.msra.mxu0 %v109
    %221 = vmatprep.subr.mxu0 0.0
    %222 = vmatpush1.msra.mxu0 %v110
    %223 = vmatprep.subr.mxu0 0.0
    %224 = vmatpush1.msra.mxu0 %v111
    %225 = vmatprep.subr.mxu0 0.0
    %226 = vmatpush1.msra.mxu0 %v112
    %227 = vmatprep.subr.mxu0 0.0
    %228 = vmatpush1.msra.mxu0 %v113
    %229 = vmatprep.subr.mxu0 0.0
    %230 = vmatpush1.msra.mxu0 %v114
    %231 = vmatprep.subr.mxu0 0.0
    %232 = vmatpush1.msra.mxu0 %v115
    %233 = vmatprep.subr.mxu0 0.0
    %234 = vmatpush1.msra.mxu0 %v116
    %235 = vmatprep.subr.mxu0 0.0
    %236 = vmatpush1.msra.mxu0 %v117
    %237 = vmatprep.subr.mxu0 0.0
    %238 = vmatpush1.msra.mxu0 %v118
    %239 = vmatprep.subr.mxu0 0.0
    %240 = vmatpush1.msra.mxu0 %v119
    %241 = vmatprep.subr.mxu0 0.0
    %242 = vmatpush1.msra.mxu0 %v120
    %243 = vmatprep.subr.mxu0 0.0
    %244 = vmatpush1.msra.mxu0 %v121
    %245 = vmatprep.subr.mxu0 0.0
    %246 = vmatpush1.msra.mxu0 %v122
    %247 = vmatprep.subr.mxu0 0.0
    %248 = vmatpush1.msra.mxu0 %v123
    %249 = vmatprep.subr.mxu0 0.0
    %250 = vmatpush1.msra.mxu0 %v124
    %251 = vmatprep.subr.mxu0 0.0
    %252 = vmatpush1.msra.mxu0 0.0
    %253 = vmatprep.subr.mxu0 0.0
    %254 = vmatpush1.msra.mxu0 0.0
    %255 = vmatprep.subr.mxu0 0.0
    %256 = vmatpush1.msra.mxu0 0.0
    %257 = vmatprep.subr.mxu0 0.0
    %258 = vmatpush1.msra.mxu0 0.0
    %259 = vmatprep.subr.mxu0 0.0
    %260 = vmatpush1.msra.mxu0 0.0
    %261 = vmatprep.subr.mxu0 0.0
    %262 = vmatpush1.msra.mxu0 0.0
    %263 = vmatprep.subr.mxu0 0.0
    %264 = vmatpush1.msra.mxu0 0.0
    %265 = vmatprep.subr.mxu0 0.0
    %266 = vmatpush1.msra.mxu0 0.0
    %267 = vmatprep.subr.mxu0 0.0
    %268 = vmatpush1.msra.mxu0 0.0
    %269 = vmatprep.subr.mxu0 0.0
    %270 = vmatpush1.msra.mxu0 0.0
    %271 = vmatprep.subr.mxu0 0.0
    %272 = vmatpush1.msra.mxu0 0.0
    %273 = vmatprep.subr.mxu0 0.0
    %274 = vmatpush1.msra.mxu0 0.0
    %275 = vmatprep.subr.mxu0 0.0
    %276 = vmatpush1.msra.mxu0 0.0
    %277 = vmatprep.subr.mxu0 0.0
    %278 = vmatpush1.msra.mxu0 0.0
    %279 = vmatprep.subr.mxu0 0.0
    %280 = vmatpush1.msra.mxu0 0.0
    %281 = vmatprep.subr.mxu0 0.0
    %282 = vmatpush1.msra.mxu0 0.0
    %283 = vmatprep.mubr.f32.mxu0 0.0
    %284 = vmatmul.mubr.f32.gmra.mrb[0].mxu0 %v107
    %v285 = vpop.f32.mrb[0].mxu0
    %v286 = vadd.f32 %v211, %v285
    %v287 = vpop.f32.mrb[0].mxu0
    %288 = vmatprep.mubr.f32.mxu0 0.0
    %289 = vmatmul.mubr.f32.gmra.mrb[0].mxu0 %v108
    %v290 = vpop.f32.mrb[0].mxu0
    %v291 = vadd.f32 %v216, %v290
    %v292 = vpop.f32.mrb[0].mxu0
    %293 = vdwg.mxu0
    %v294 = vld [vmem:[#allocation2 + $0x2] sm:$0xff]
    %v295 = vld [vmem:[#allocation2 + $0xa] sm:$0xff]
    %s296 = scalar_lea.vmem [#allocation7], 256
    %v297 = vld [vmem:[%s296] sm:$0xff]
    %v298 = vld [vmem:[%s296 + $0x8] sm:$0xff]
    %v299 = vld [vmem:[%s296 + $0x10] sm:$0xff]
    %v300 = vld [vmem:[%s296 + $0x18] sm:$0xff]
    %v301 = vld [vmem:[%s296 + $0x20] sm:$0xff]
    %v302 = vld [vmem:[%s296 + $0x28] sm:$0xff]
    %v303 = vld [vmem:[%s296 + $0x30] sm:$0xff]
    %v304 = vld [vmem:[%s296 + $0x38] sm:$0xff]
    %v305 = vld [vmem:[%s296 + $0x40] sm:$0xff]
    %v306 = vld [vmem:[%s296 + $0x48] sm:$0xff]
    %v307 = vld [vmem:[%s296 + $0x50] sm:$0xff]
    %v308 = vld [vmem:[%s296 + $0x58] sm:$0xff]
    %v309 = vld [vmem:[%s296 + $0x60] sm:$0xff]
    %v310 = vld [vmem:[%s296 + $0x68] sm:$0xff]
    %v311 = vld [vmem:[%s296 + $0x70] sm:$0xff]
    %v312 = vld [vmem:[%s296 + $0x78] sm:$0xff]
    %313 = vmatprep.subr.mxu0 0.0
    %314 = vmatpush1.msra.mxu0 %v297
    %315 = vmatprep.subr.mxu0 0.0
    %316 = vmatpush1.msra.mxu0 %v298
    %317 = vmatprep.subr.mxu0 0.0
    %318 = vmatpush1.msra.mxu0 %v299
    %319 = vmatprep.subr.mxu0 0.0
    %320 = vmatpush1.msra.mxu0 %v300
    %321 = vmatprep.subr.mxu0 0.0
    %322 = vmatpush1.msra.mxu0 %v301
    %323 = vmatprep.subr.mxu0 0.0
    %324 = vmatpush1.msra.mxu0 %v302
    %325 = vmatprep.subr.mxu0 0.0
    %326 = vmatpush1.msra.mxu0 %v303
    %327 = vmatprep.subr.mxu0 0.0
    %328 = vmatpush1.msra.mxu0 %v304
    %329 = vmatprep.subr.mxu0 0.0
    %330 = vmatpush1.msra.mxu0 %v305
    %331 = vmatprep.subr.mxu0 0.0
    %332 = vmatpush1.msra.mxu0 %v306
    %333 = vmatprep.subr.mxu0 0.0
    %334 = vmatpush1.msra.mxu0 %v307
    %335 = vmatprep.subr.mxu0 0.0
    %336 = vmatpush1.msra.mxu0 %v308
    %337 = vmatprep.subr.mxu0 0.0
    %338 = vmatpush1.msra.mxu0 %v309
    %339 = vmatprep.subr.mxu0 0.0
    %340 = vmatpush1.msra.mxu0 %v310
    %341 = vmatprep.subr.mxu0 0.0
    %342 = vmatpush1.msra.mxu0 %v311
    %343 = vmatprep.subr.mxu0 0.0
    %344 = vmatpush1.msra.mxu0 %v312
    %345 = vmatprep.subr.mxu0 0.0
    %346 = vmatpush1.msra.mxu0 0.0
    %347 = vmatprep.subr.mxu0 0.0
    %348 = vmatpush1.msra.mxu0 0.0
    %349 = vmatprep.subr.mxu0 0.0
    %350 = vmatpush1.msra.mxu0 0.0
    %351 = vmatprep.subr.mxu0 0.0
    %352 = vmatpush1.msra.mxu0 0.0
    %353 = vmatprep.subr.mxu0 0.0
    %354 = vmatpush1.msra.mxu0 0.0
    %355 = vmatprep.subr.mxu0 0.0
    %356 = vmatpush1.msra.mxu0 0.0
    %357 = vmatprep.subr.mxu0 0.0
    %358 = vmatpush1.msra.mxu0 0.0
    %359 = vmatprep.subr.mxu0 0.0
    %360 = vmatpush1.msra.mxu0 0.0
    %361 = vmatprep.subr.mxu0 0.0
    %362 = vmatpush1.msra.mxu0 0.0
    %363 = vmatprep.subr.mxu0 0.0
    %364 = vmatpush1.msra.mxu0 0.0
    %365 = vmatprep.subr.mxu0 0.0
    %366 = vmatpush1.msra.mxu0 0.0
    %367 = vmatprep.subr.mxu0 0.0
    %368 = vmatpush1.msra.mxu0 0.0
    %369 = vmatprep.subr.mxu0 0.0
    %370 = vmatpush1.msra.mxu0 0.0
    %371 = vmatprep.subr.mxu0 0.0
    %372 = vmatpush1.msra.mxu0 0.0
    %373 = vmatprep.subr.mxu0 0.0
    %374 = vmatpush1.msra.mxu0 0.0
    %375 = vmatprep.subr.mxu0 0.0
    %376 = vmatpush1.msra.mxu0 0.0
    %377 = vmatprep.mubr.f32.mxu0 0.0
    %378 = vmatmul.mubr.f32.gmra.mrb[0].mxu0 %v294
    %v379 = vpop.f32.mrb[0].mxu0
    %v380 = vadd.f32 0.0, %v379
    %v381 = vpop.f32.mrb[0].mxu0
    %382 = vmatprep.mubr.f32.mxu0 0.0
    %383 = vmatmul.mubr.f32.gmra.mrb[0].mxu0 %v295
    %v384 = vpop.f32.mrb[0].mxu0
    %v385 = vadd.f32 0.0, %v384
    %v386 = vpop.f32.mrb[0].mxu0
    %387 = vdwg.mxu0
    %v388 = vadd.f32 %v286, %v380
    %v389 = vadd.f32 %v291, %v385
    %v390 = vadd.f32 %v388, %v389
    %v391 = vrot.slane %v390, 4
    %v392 = vadd.f32 %v390, %v391
    %v393 = vrot.slane %v392, 2
    %v394 = vadd.f32 %v392, %v393
    %v395 = vrot.slane %v394, 1
    %v396 = vadd.f32 %v394, %v395
    %v397 = vmul.f32 %v388, %v388
    %v398 = vmul.f32 %v389, %v389
    %v399 = vadd.f32 %v397, %v398
    %v400 = vrot.slane %v399, 4
    %v401 = vadd.f32 %v399, %v400
    %v402 = vrot.slane %v401, 2
    %v403 = vadd.f32 %v401, %v402
    %v404 = vrot.slane %v403, 1
    %v405 = vadd.f32 %v403, %v404
    %406 = vmatprep.subr.mxu0 0.0
    %407 = vmatpush1.msra.mxu0 %v85
    %408 = vmatprep.subr.mxu0 0.0
    %409 = vmatpush1.msra.mxu0 %v86
    %410 = vmatprep.subr.mxu0 0.0
    %411 = vmatpush1.msra.mxu0 %v87
    %412 = vmatprep.subr.mxu0 0.0
    %413 = vmatpush1.msra.mxu0 %v88
    %414 = vmatprep.subr.mxu0 0.0
    %415 = vmatpush1.msra.mxu0 %v89
    %416 = vmatprep.subr.mxu0 0.0
    %417 = vmatpush1.msra.mxu0 %v90
    %418 = vmatprep.subr.mxu0 0.0
    %419 = vmatpush1.msra.mxu0 %v91
    %420 = vmatprep.subr.mxu0 0.0
    %421 = vmatpush1.msra.mxu0 %v92
    %422 = vmatprep.subr.mxu0 0.0
    %423 = vmatpush1.msra.mxu0 %v93
    %424 = vmatprep.subr.mxu0 0.0
    %425 = vmatpush1.msra.mxu0 %v94
    %426 = vmatprep.subr.mxu0 0.0
    %427 = vmatpush1.msra.mxu0 %v95
    %428 = vmatprep.subr.mxu0 0.0
    %429 = vmatpush1.msra.mxu0 %v96
    %430 = vmatprep.subr.mxu0 0.0
    %431 = vmatpush1.msra.mxu0 %v97
    %432 = vmatprep.subr.mxu0 0.0
    %433 = vmatpush1.msra.mxu0 %v98
    %434 = vmatprep.subr.mxu0 0.0
    %435 = vmatpush1.msra.mxu0 %v99
    %436 = vmatprep.subr.mxu0 0.0
    %437 = vmatpush1.msra.mxu0 %v100
    %438 = vmatprep.subr.mxu0 0.0
    %439 = vmatpush1.msra.mxu0 0.0
    %440 = vmatprep.subr.mxu0 0.0
    %441 = vmatpush1.msra.mxu0 0.0
    %442 = vmatprep.subr.mxu0 0.0
    %443 = vmatpush1.msra.mxu0 0.0
    %444 = vmatprep.subr.mxu0 0.0
    %445 = vmatpush1.msra.mxu0 0.0
    %446 = vmatprep.subr.mxu0 0.0
    %447 = vmatpush1.msra.mxu0 0.0
    %448 = vmatprep.subr.mxu0 0.0
    %449 = vmatpush1.msra.mxu0 0.0
    %450 = vmatprep.subr.mxu0 0.0
    %451 = vmatpush1.msra.mxu0 0.0
    %452 = vmatprep.subr.mxu0 0.0
    %453 = vmatpush1.msra.mxu0 0.0
    %454 = vmatprep.subr.mxu0 0.0
    %455 = vmatpush1.msra.mxu0 0.0
    %456 = vmatprep.subr.mxu0 0.0
    %457 = vmatpush1.msra.mxu0 0.0
    %458 = vmatprep.subr.mxu0 0.0
    %459 = vmatpush1.msra.mxu0 0.0
    %460 = vmatprep.subr.mxu0 0.0
    %461 = vmatpush1.msra.mxu0 0.0
    %462 = vmatprep.subr.mxu0 0.0
    %463 = vmatpush1.msra.mxu0 0.0
    %464 = vmatprep.subr.mxu0 0.0
    %465 = vmatpush1.msra.mxu0 0.0
    %466 = vmatprep.subr.mxu0 0.0
    %467 = vmatpush1.msra.mxu0 0.0
    %468 = vmatprep.subr.mxu0 0.0
    %469 = vmatpush1.msra.mxu0 0.0
    %470 = vmatprep.mubr.f32.mxu0 0.0
    %471 = vmatmul.mubr.f32.gmra.mrb[0].mxu0 %v396
    %v472 = vpop.f32.mrb[0].mxu0
    %v473 = vadd.f32 0.0, %v472
    %v474 = vpop.f32.mrb[0].mxu0
    %475 = vdwg.mxu0
    %v476 = vmul.f32 %v473, 0.001953125
    %477 = vmatprep.subr.mxu0 0.0
    %478 = vmatpush1.msra.mxu0 %v85
    %479 = vmatprep.subr.mxu0 0.0
    %480 = vmatpush1.msra.mxu0 %v86
    %481 = vmatprep.subr.mxu0 0.0
    %482 = vmatpush1.msra.mxu0 %v87
    %483 = vmatprep.subr.mxu0 0.0
    %484 = vmatpush1.msra.mxu0 %v88
    %485 = vmatprep.subr.mxu0 0.0
    %486 = vmatpush1.msra.mxu0 %v89
    %487 = vmatprep.subr.mxu0 0.0
    %488 = vmatpush1.msra.mxu0 %v90
    %489 = vmatprep.subr.mxu0 0.0
    %490 = vmatpush1.msra.mxu0 %v91
    %491 = vmatprep.subr.mxu0 0.0
    %492 = vmatpush1.msra.mxu0 %v92
    %493 = vmatprep.subr.mxu0 0.0
    %494 = vmatpush1.msra.mxu0 %v93
    %495 = vmatprep.subr.mxu0 0.0
    %496 = vmatpush1.msra.mxu0 %v94
    %497 = vmatprep.subr.mxu0 0.0
    %498 = vmatpush1.msra.mxu0 %v95
    %499 = vmatprep.subr.mxu0 0.0
    %500 = vmatpush1.msra.mxu0 %v96
    %501 = vmatprep.subr.mxu0 0.0
    %502 = vmatpush1.msra.mxu0 %v97
    %503 = vmatprep.subr.mxu0 0.0
    %504 = vmatpush1.msra.mxu0 %v98
    %505 = vmatprep.subr.mxu0 0.0
    %506 = vmatpush1.msra.mxu0 %v99
    %507 = vmatprep.subr.mxu0 0.0
    %508 = vmatpush1.msra.mxu0 %v100
    %509 = vmatprep.subr.mxu0 0.0
    %510 = vmatpush1.msra.mxu0 0.0
    %511 = vmatprep.subr.mxu0 0.0
    %512 = vmatpush1.msra.mxu0 0.0
    %513 = vmatprep.subr.mxu0 0.0
    %514 = vmatpush1.msra.mxu0 0.0
    %515 = vmatprep.subr.mxu0 0.0
    %516 = vmatpush1.msra.mxu0 0.0
    %517 = vmatprep.subr.mxu0 0.0
    %518 = vmatpush1.msra.mxu0 0.0
    %519 = vmatprep.subr.mxu0 0.0
    %520 = vmatpush1.msra.mxu0 0.0
    %521 = vmatprep.subr.mxu0 0.0
    %522 = vmatpush1.msra.mxu0 0.0
    %523 = vmatprep.subr.mxu0 0.0
    %524 = vmatpush1.msra.mxu0 0.0
    %525 = vmatprep.subr.mxu0 0.0
    %526 = vmatpush1.msra.mxu0 0.0
    %527 = vmatprep.subr.mxu0 0.0
    %528 = vmatpush1.msra.mxu0 0.0
    %529 = vmatprep.subr.mxu0 0.0
    %530 = vmatpush1.msra.mxu0 0.0
    %531 = vmatprep.subr.mxu0 0.0
    %532 = vmatpush1.msra.mxu0 0.0
    %533 = vmatprep.subr.mxu0 0.0
    %534 = vmatpush1.msra.mxu0 0.0
    %535 = vmatprep.subr.mxu0 0.0
    %536 = vmatpush1.msra.mxu0 0.0
    %537 = vmatprep.subr.mxu0 0.0
    %538 = vmatpush1.msra.mxu0 0.0
    %539 = vmatprep.subr.mxu0 0.0
    %540 = vmatpush1.msra.mxu0 0.0
    %541 = vmatprep.mubr.f32.mxu0 0.0
    %542 = vmatmul.mubr.f32.gmra.mrb[0].mxu0 %v405
    %v543 = vpop.f32.mrb[0].mxu0
    %v544 = vadd.f32 0.0, %v543
    %v545 = vpop.f32.mrb[0].mxu0
    %546 = vdwg.mxu0
    %v547 = vmul.f32 %v544, 0.001953125
    %v548 = vmul.f32 %v476, %v476
    %v549 = vsub.f32 %v547, %v548
    %v550 = vld [vmem:[%s4] sm:$0x1]
    %v551 = vadd.f32 %v549, 1e-05
    %v552 = vrsqrt.pop %v551
    %v553 = vmul.f32 %v550, %v552
    %v554 = vld [vmem:[%s5] sm:$0x1]
    %v555 = vmul.f32 %v476, %v553
    %v556 = vsub.f32 %v554, %v555
    %v558 = vlaneseq
    %v559 = vshrl.u32 %v558, 7
    %v560 = vsub.s32 0, %v559
    %v561 = vrot.slane %v553, %v560
    %v563 = vmul.f32 %v388, %v561
    %v564 = vmul.f32 %v389, %v561
    %v566 = vlaneseq
    %v567 = vshrl.u32 %v566, 7
    %v568 = vsub.s32 0, %v567
    %v569 = vrot.slane %v556, %v568
    %v571 = vadd.f32 %v563, %v569
    %v572 = vadd.f32 %v564, %v569
    %v573 = vmax.f32 %v571, 0.0
    %v574 = vmax.f32 %v572, 0.0
    %575 = vst [vmem:[#allocation3 + $0x1] sm:$0xff] %v573
    %576 = vst [vmem:[#allocation3 + $0x9] sm:$0xff] %v574
    %577 = vst [vmem:[#allocation3 - $0x1] sm:$0x2] %v573
    %578 = vst [vmem:[#allocation3 + $0xb] sm:$0x40] %v574
    %v579 = vld [vmem:[#allocation3] sm:$0xff]
    %v580 = vld [vmem:[#allocation3 + $0x8] sm:$0xff]
    %v581 = vld [vmem:[#allocation9] sm:$0xff]
    %v582 = vld [vmem:[#allocation9 + $0x8] sm:$0xff]
    %v583 = vld [vmem:[#allocation9 + $0x10] sm:$0xff]
    %v584 = vld [vmem:[#allocation9 + $0x18] sm:$0xff]
    %v585 = vld [vmem:[#allocation9 + $0x20] sm:$0xff]
    %v586 = vld [vmem:[#allocation9 + $0x28] sm:$0xff]
    %v587 = vld [vmem:[#allocation9 + $0x30] sm:$0xff]
    %v588 = vld [vmem:[#allocation9 + $0x38] sm:$0xff]
    %v589 = vld [vmem:[#allocation9 + $0x40] sm:$0xff]
    %v590 = vld [vmem:[#allocation9 + $0x48] sm:$0xff]
    %v591 = vld [vmem:[#allocation9 + $0x50] sm:$0xff]
    %v592 = vld [vmem:[#allocation9 + $0x58] sm:$0xff]
    %v593 = vld [vmem:[#allocation9 + $0x60] sm:$0xff]
    %v594 = vld [vmem:[#allocation9 + $0x68] sm:$0xff]
    %v595 = vld [vmem:[#allocation9 + $0x70] sm:$0xff]
    %v596 = vld [vmem:[#allocation9 + $0x78] sm:$0xff]
    %v597 = vld [vmem:[#allocation3 + $0x1] sm:$0xff]
    %v598 = vld [vmem:[#allocation3 + $0x9] sm:$0xff]
    %s599 = scalar_lea.vmem [#allocation9], 128
    %v600 = vld [vmem:[%s599] sm:$0xff]
    %v601 = vld [vmem:[%s599 + $0x8] sm:$0xff]
    %v602 = vld [vmem:[%s599 + $0x10] sm:$0xff]
    %v603 = vld [vmem:[%s599 + $0x18] sm:$0xff]
    %v604 = vld [vmem:[%s599 + $0x20] sm:$0xff]
    %v605 = vld [vmem:[%s599 + $0x28] sm:$0xff]
    %v606 = vld [vmem:[%s599 + $0x30] sm:$0xff]
    %v607 = vld [vmem:[%s599 + $0x38] sm:$0xff]
    %v608 = vld [vmem:[%s599 + $0x40] sm:$0xff]
    %v609 = vld [vmem:[%s599 + $0x48] sm:$0xff]
    %v610 = vld [vmem:[%s599 + $0x50] sm:$0xff]
    %v611 = vld [vmem:[%s599 + $0x58] sm:$0xff]
    %v612 = vld [vmem:[%s599 + $0x60] sm:$0xff]
    %v613 = vld [vmem:[%s599 + $0x68] sm:$0xff]
    %v614 = vld [vmem:[%s599 + $0x70] sm:$0xff]
    %v615 = vld [vmem:[%s599 + $0x78] sm:$0xff]
    %616 = vmatprep.subr.mxu0 0.0
    %617 = vmatpush1.msra.mxu0 %v600
    %618 = vmatprep.subr.mxu0 0.0
    %619 = vmatpush1.msra.mxu0 %v601
    %620 = vmatprep.subr.mxu0 0.0
    %621 = vmatpush1.msra.mxu0 %v602
    %622 = vmatprep.subr.mxu0 0.0
    %623 = vmatpush1.msra.mxu0 %v603
    %624 = vmatprep.subr.mxu0 0.0
    %625 = vmatpush1.msra.mxu0 %v604
    %626 = vmatprep.subr.mxu0 0.0
    %627 = vmatpush1.msra.mxu0 %v605
    %628 = vmatprep.subr.mxu0 0.0
    %629 = vmatpush1.msra.mxu0 %v606
    %630 = vmatprep.subr.mxu0 0.0
    %631 = vmatpush1.msra.mxu0 %v607
    %632 = vmatprep.subr.mxu0 0.0
    %633 = vmatpush1.msra.mxu0 %v608
    %634 = vmatprep.subr.mxu0 0.0
    %635 = vmatpush1.msra.mxu0 %v609
    %636 = vmatprep.subr.mxu0 0.0
    %637 = vmatpush1.msra.mxu0 %v610
    %638 = vmatprep.subr.mxu0 0.0
    %639 = vmatpush1.msra.mxu0 %v611
    %640 = vmatprep.subr.mxu0 0.0
    %641 = vmatpush1.msra.mxu0 %v612
    %642 = vmatprep.subr.mxu0 0.0
    %643 = vmatpush1.msra.mxu0 %v613
    %644 = vmatprep.subr.mxu0 0.0
    %645 = vmatpush1.msra.mxu0 %v614
    %646 = vmatprep.subr.mxu0 0.0
    %647 = vmatpush1.msra.mxu0 %v615
    %648 = vmatprep.subr.mxu0 0.0
    %649 = vmatpush1.msra.mxu0 0.0
    %650 = vmatprep.subr.mxu0 0.0
    %651 = vmatpush1.msra.mxu0 0.0
    %652 = vmatprep.subr.mxu0 0.0
    %653 = vmatpush1.msra.mxu0 0.0
    %654 = vmatprep.subr.mxu0 0.0
    %655 = vmatpush1.msra.mxu0 0.0
    %656 = vmatprep.subr.mxu0 0.0
    %657 = vmatpush1.msra.mxu0 0.0
    %658 = vmatprep.subr.mxu0 0.0
    %659 = vmatpush1.msra.mxu0 0.0
    %660 = vmatprep.subr.mxu0 0.0
    %661 = vmatpush1.msra.mxu0 0.0
    %662 = vmatprep.subr.mxu0 0.0
    %663 = vmatpush1.msra.mxu0 0.0
    %664 = vmatprep.subr.mxu0 0.0
    %665 = vmatpush1.msra.mxu0 0.0
    %666 = vmatprep.subr.mxu0 0.0
    %667 = vmatpush1.msra.mxu0 0.0
    %668 = vmatprep.subr.mxu0 0.0
    %669 = vmatpush1.msra.mxu0 0.0
    %670 = vmatprep.subr.mxu0 0.0
    %671 = vmatpush1.msra.mxu0 0.0
    %672 = vmatprep.subr.mxu0 0.0
    %673 = vmatpush1.msra.mxu0 0.0
    %674 = vmatprep.subr.mxu0 0.0
    %675 = vmatpush1.msra.mxu0 0.0
    %676 = vmatprep.subr.mxu0 0.0
    %677 = vmatpush1.msra.mxu0 0.0
    %678 = vmatprep.subr.mxu0 0.0
    %679 = vmatpush1.msra.mxu0 0.0
    %680 = vmatprep.mubr.f32.mxu0 0.0
    %681 = vmatmul.mubr.f32.gmra.mrb[0].mxu0 %v597
    %v682 = vpop.f32.mrb[0].mxu0
    %v683 = vadd.f32 0.0, %v682
    %v684 = vpop.f32.mrb[0].mxu0
    %685 = vmatprep.mubr.f32.mxu0 0.0
    %686 = vmatmul.mubr.f32.gmra.mrb[0].mxu0 %v598
    %v687 = vpop.f32.mrb[0].mxu0
    %v688 = vadd.f32 0.0, %v687
    %v689 = vpop.f32.mrb[0].mxu0
    %690 = vdwg.mxu0
    %691 = vmatprep.subr.mxu0 0.0
    %692 = vmatpush1.msra.mxu0 %v581
    %693 = vmatprep.subr.mxu0 0.0
    %694 = vmatpush1.msra.mxu0 %v582
    %695 = vmatprep.subr.mxu0 0.0
    %696 = vmatpush1.msra.mxu0 %v583
    %697 = vmatprep.subr.mxu0 0.0
    %698 = vmatpush1.msra.mxu0 %v584
    %699 = vmatprep.subr.mxu0 0.0
    %700 = vmatpush1.msra.mxu0 %v585
    %701 = vmatprep.subr.mxu0 0.0
    %702 = vmatpush1.msra.mxu0 %v586
    %703 = vmatprep.subr.mxu0 0.0
    %704 = vmatpush1.msra.mxu0 %v587
    %705 = vmatprep.subr.mxu0 0.0
    %706 = vmatpush1.msra.mxu0 %v588
    %707 = vmatprep.subr.mxu0 0.0
    %708 = vmatpush1.msra.mxu0 %v589
    %709 = vmatprep.subr.mxu0 0.0
    %710 = vmatpush1.msra.mxu0 %v590
    %711 = vmatprep.subr.mxu0 0.0
    %712 = vmatpush1.msra.mxu0 %v591
    %713 = vmatprep.subr.mxu0 0.0
    %714 = vmatpush1.msra.mxu0 %v592
    %715 = vmatprep.subr.mxu0 0.0
    %716 = vmatpush1.msra.mxu0 %v593
    %717 = vmatprep.subr.mxu0 0.0
    %718 = vmatpush1.msra.mxu0 %v594
    %719 = vmatprep.subr.mxu0 0.0
    %720 = vmatpush1.msra.mxu0 %v595
    %721 = vmatprep.subr.mxu0 0.0
    %722 = vmatpush1.msra.mxu0 %v596
    %723 = vmatprep.subr.mxu0 0.0
    %724 = vmatpush1.msra.mxu0 0.0
    %725 = vmatprep.subr.mxu0 0.0
    %726 = vmatpush1.msra.mxu0 0.0
    %727 = vmatprep.subr.mxu0 0.0
    %728 = vmatpush1.msra.mxu0 0.0
    %729 = vmatprep.subr.mxu0 0.0
    %730 = vmatpush1.msra.mxu0 0.0
    %731 = vmatprep.subr.mxu0 0.0
    %732 = vmatpush1.msra.mxu0 0.0
    %733 = vmatprep.subr.mxu0 0.0
    %734 = vmatpush1.msra.mxu0 0.0
    %735 = vmatprep.subr.mxu0 0.0
    %736 = vmatpush1.msra.mxu0 0.0
    %737 = vmatprep.subr.mxu0 0.0
    %738 = vmatpush1.msra.mxu0 0.0
    %739 = vmatprep.subr.mxu0 0.0
    %740 = vmatpush1.msra.mxu0 0.0
    %741 = vmatprep.subr.mxu0 0.0
    %742 = vmatpush1.msra.mxu0 0.0
    %743 = vmatprep.subr.mxu0 0.0
    %744 = vmatpush1.msra.mxu0 0.0
    %745 = vmatprep.subr.mxu0 0.0
    %746 = vmatpush1.msra.mxu0 0.0
    %747 = vmatprep.subr.mxu0 0.0
    %748 = vmatpush1.msra.mxu0 0.0
    %749 = vmatprep.subr.mxu0 0.0
    %750 = vmatpush1.msra.mxu0 0.0
    %751 = vmatprep.subr.mxu0 0.0
    %752 = vmatpush1.msra.mxu0 0.0
    %753 = vmatprep.subr.mxu0 0.0
    %754 = vmatpush1.msra.mxu0 0.0
    %755 = vmatprep.mubr.f32.mxu0 0.0
    %756 = vmatmul.mubr.f32.gmra.mrb[0].mxu0 %v579
    %v757 = vpop.f32.mrb[0].mxu0
    %v758 = vadd.f32 %v683, %v757
    %v759 = vpop.f32.mrb[0].mxu0
    %760 = vmatprep.mubr.f32.mxu0 0.0
    %761 = vmatmul.mubr.f32.gmra.mrb[0].mxu0 %v580
    %v762 = vpop.f32.mrb[0].mxu0
    %v763 = vadd.f32 %v688, %v762
    %v764 = vpop.f32.mrb[0].mxu0
    %765 = vdwg.mxu0
    %v766 = vld [vmem:[#allocation3 + $0x2] sm:$0xff]
    %v767 = vld [vmem:[#allocation3 + $0xa] sm:$0xff]
    %s768 = scalar_lea.vmem [#allocation9], 256
    %v769 = vld [vmem:[%s768] sm:$0xff]
    %v770 = vld [vmem:[%s768 + $0x8] sm:$0xff]
    %v771 = vld [vmem:[%s768 + $0x10] sm:$0xff]
    %v772 = vld [vmem:[%s768 + $0x18] sm:$0xff]
    %v773 = vld [vmem:[%s768 + $0x20] sm:$0xff]
    %v774 = vld [vmem:[%s768 + $0x28] sm:$0xff]
    %v775 = vld [vmem:[%s768 + $0x30] sm:$0xff]
    %v776 = vld [vmem:[%s768 + $0x38] sm:$0xff]
    %v777 = vld [vmem:[%s768 + $0x40] sm:$0xff]
    %v778 = vld [vmem:[%s768 + $0x48] sm:$0xff]
    %v779 = vld [vmem:[%s768 + $0x50] sm:$0xff]
    %v780 = vld [vmem:[%s768 + $0x58] sm:$0xff]
    %v781 = vld [vmem:[%s768 + $0x60] sm:$0xff]
    %v782 = vld [vmem:[%s768 + $0x68] sm:$0xff]
    %v783 = vld [vmem:[%s768 + $0x70] sm:$0xff]
    %v784 = vld [vmem:[%s768 + $0x78] sm:$0xff]
    %785 = vmatprep.subr.mxu0 0.0
    %786 = vmatpush1.msra.mxu0 %v769
    %787 = vmatprep.subr.mxu0 0.0
    %788 = vmatpush1.msra.mxu0 %v770
    %789 = vmatprep.subr.mxu0 0.0
    %790 = vmatpush1.msra.mxu0 %v771
    %791 = vmatprep.subr.mxu0 0.0
    %792 = vmatpush1.msra.mxu0 %v772
    %793 = vmatprep.subr.mxu0 0.0
    %794 = vmatpush1.msra.mxu0 %v773
    %795 = vmatprep.subr.mxu0 0.0
    %796 = vmatpush1.msra.mxu0 %v774
    %797 = vmatprep.subr.mxu0 0.0
    %798 = vmatpush1.msra.mxu0 %v775
    %799 = vmatprep.subr.mxu0 0.0
    %800 = vmatpush1.msra.mxu0 %v776
    %801 = vmatprep.subr.mxu0 0.0
    %802 = vmatpush1.msra.mxu0 %v777
    %803 = vmatprep.subr.mxu0 0.0
    %804 = vmatpush1.msra.mxu0 %v778
    %805 = vmatprep.subr.mxu0 0.0
    %806 = vmatpush1.msra.mxu0 %v779
    %807 = vmatprep.subr.mxu0 0.0
    %808 = vmatpush1.msra.mxu0 %v780
    %809 = vmatprep.subr.mxu0 0.0
    %810 = vmatpush1.msra.mxu0 %v781
    %811 = vmatprep.subr.mxu0 0.0
    %812 = vmatpush1.msra.mxu0 %v782
    %813 = vmatprep.subr.mxu0 0.0
    %814 = vmatpush1.msra.mxu0 %v783
    %815 = vmatprep.subr.mxu0 0.0
    %816 = vmatpush1.msra.mxu0 %v784
    %817 = vmatprep.subr.mxu0 0.0
    %818 = vmatpush1.msra.mxu0 0.0
    %819 = vmatprep.subr.mxu0 0.0
    %820 = vmatpush1.msra.mxu0 0.0
    %821 = vmatprep.subr.mxu0 0.0
    %822 = vmatpush1.msra.mxu0 0.0
    %823 = vmatprep.subr.mxu0 0.0
    %824 = vmatpush1.msra.mxu0 0.0
    %825 = vmatprep.subr.mxu0 0.0
    %826 = vmatpush1.msra.mxu0 0.0
    %827 = vmatprep.subr.mxu0 0.0
    %828 = vmatpush1.msra.mxu0 0.0
    %829 = vmatprep.subr.mxu0 0.0
    %830 = vmatpush1.msra.mxu0 0.0
    %831 = vmatprep.subr.mxu0 0.0
    %832 = vmatpush1.msra.mxu0 0.0
    %833 = vmatprep.subr.mxu0 0.0
    %834 = vmatpush1.msra.mxu0 0.0
    %835 = vmatprep.subr.mxu0 0.0
    %836 = vmatpush1.msra.mxu0 0.0
    %837 = vmatprep.subr.mxu0 0.0
    %838 = vmatpush1.msra.mxu0 0.0
    %839 = vmatprep.subr.mxu0 0.0
    %840 = vmatpush1.msra.mxu0 0.0
    %841 = vmatprep.subr.mxu0 0.0
    %842 = vmatpush1.msra.mxu0 0.0
    %843 = vmatprep.subr.mxu0 0.0
    %844 = vmatpush1.msra.mxu0 0.0
    %845 = vmatprep.subr.mxu0 0.0
    %846 = vmatpush1.msra.mxu0 0.0
    %847 = vmatprep.subr.mxu0 0.0
    %848 = vmatpush1.msra.mxu0 0.0
    %849 = vmatprep.mubr.f32.mxu0 0.0
    %850 = vmatmul.mubr.f32.gmra.mrb[0].mxu0 %v766
    %v851 = vpop.f32.mrb[0].mxu0
    %v852 = vadd.f32 0.0, %v851
    %v853 = vpop.f32.mrb[0].mxu0
    %854 = vmatprep.mubr.f32.mxu0 0.0
    %855 = vmatmul.mubr.f32.gmra.mrb[0].mxu0 %v767
    %v856 = vpop.f32.mrb[0].mxu0
    %v857 = vadd.f32 0.0, %v856
    %v858 = vpop.f32.mrb[0].mxu0
    %859 = vdwg.mxu0
    %v860 = vadd.f32 %v758, %v852
    %v861 = vadd.f32 %v763, %v857
    %v862 = vadd.f32 %v860, %v861
    %v863 = vrot.slane %v862, 4
    %v864 = vadd.f32 %v862, %v863
    %v865 = vrot.slane %v864, 2
    %v866 = vadd.f32 %v864, %v865
    %v867 = vrot.slane %v866, 1
    %v868 = vadd.f32 %v866, %v867
    %v869 = vmul.f32 %v860, %v860
    %v870 = vmul.f32 %v861, %v861
    %v871 = vadd.f32 %v869, %v870
    %v872 = vrot.slane %v871, 4
    %v873 = vadd.f32 %v871, %v872
    %v874 = vrot.slane %v873, 2
    %v875 = vadd.f32 %v873, %v874
    %v876 = vrot.slane %v875, 1
    %v877 = vadd.f32 %v875, %v876
    %878 = vmatprep.subr.mxu0 0.0
    %879 = vmatpush1.msra.mxu0 %v85
    %880 = vmatprep.subr.mxu0 0.0
    %881 = vmatpush1.msra.mxu0 %v86
    %882 = vmatprep.subr.mxu0 0.0
    %883 = vmatpush1.msra.mxu0 %v87
    %884 = vmatprep.subr.mxu0 0.0
    %885 = vmatpush1.msra.mxu0 %v88
    %886 = vmatprep.subr.mxu0 0.0
    %887 = vmatpush1.msra.mxu0 %v89
    %888 = vmatprep.subr.mxu0 0.0
    %889 = vmatpush1.msra.mxu0 %v90
    %890 = vmatprep.subr.mxu0 0.0
    %891 = vmatpush1.msra.mxu0 %v91
    %892 = vmatprep.subr.mxu0 0.0
    %893 = vmatpush1.msra.mxu0 %v92
    %894 = vmatprep.subr.mxu0 0.0
    %895 = vmatpush1.msra.mxu0 %v93
    %896 = vmatprep.subr.mxu0 0.0
    %897 = vmatpush1.msra.mxu0 %v94
    %898 = vmatprep.subr.mxu0 0.0
    %899 = vmatpush1.msra.mxu0 %v95
    %900 = vmatprep.subr.mxu0 0.0
    %901 = vmatpush1.msra.mxu0 %v96
    %902 = vmatprep.subr.mxu0 0.0
    %903 = vmatpush1.msra.mxu0 %v97
    %904 = vmatprep.subr.mxu0 0.0
    %905 = vmatpush1.msra.mxu0 %v98
    %906 = vmatprep.subr.mxu0 0.0
    %907 = vmatpush1.msra.mxu0 %v99
    %908 = vmatprep.subr.mxu0 0.0
    %909 = vmatpush1.msra.mxu0 %v100
    %910 = vmatprep.subr.mxu0 0.0
    %911 = vmatpush1.msra.mxu0 0.0
    %912 = vmatprep.subr.mxu0 0.0
    %913 = vmatpush1.msra.mxu0 0.0
    %914 = vmatprep.subr.mxu0 0.0
    %915 = vmatpush1.msra.mxu0 0.0
    %916 = vmatprep.subr.mxu0 0.0
    %917 = vmatpush1.msra.mxu0 0.0
    %918 = vmatprep.subr.mxu0 0.0
    %919 = vmatpush1.msra.mxu0 0.0
    %920 = vmatprep.subr.mxu0 0.0
    %921 = vmatpush1.msra.mxu0 0.0
    %922 = vmatprep.subr.mxu0 0.0
    %923 = vmatpush1.msra.mxu0 0.0
    %924 = vmatprep.subr.mxu0 0.0
    %925 = vmatpush1.msra.mxu0 0.0
    %926 = vmatprep.subr.mxu0 0.0
    %927 = vmatpush1.msra.mxu0 0.0
    %928 = vmatprep.subr.mxu0 0.0
    %929 = vmatpush1.msra.mxu0 0.0
    %930 = vmatprep.subr.mxu0 0.0
    %931 = vmatpush1.msra.mxu0 0.0
    %932 = vmatprep.subr.mxu0 0.0
    %933 = vmatpush1.msra.mxu0 0.0
    %934 = vmatprep.subr.mxu0 0.0
    %935 = vmatpush1.msra.mxu0 0.0
    %936 = vmatprep.subr.mxu0 0.0
    %937 = vmatpush1.msra.mxu0 0.0
    %938 = vmatprep.subr.mxu0 0.0
    %939 = vmatpush1.msra.mxu0 0.0
    %940 = vmatprep.subr.mxu0 0.0
    %941 = vmatpush1.msra.mxu0 0.0
    %942 = vmatprep.mubr.f32.mxu0 0.0
    %943 = vmatmul.mubr.f32.gmra.mrb[0].mxu0 %v868
    %v944 = vpop.f32.mrb[0].mxu0
    %v945 = vadd.f32 0.0, %v944
    %v946 = vpop.f32.mrb[0].mxu0
    %947 = vdwg.mxu0
    %v948 = vmul.f32 %v945, 0.001953125
    %949 = vmatprep.subr.mxu0 0.0
    %950 = vmatpush1.msra.mxu0 %v85
    %951 = vmatprep.subr.mxu0 0.0
    %952 = vmatpush1.msra.mxu0 %v86
    %953 = vmatprep.subr.mxu0 0.0
    %954 = vmatpush1.msra.mxu0 %v87
    %955 = vmatprep.subr.mxu0 0.0
    %956 = vmatpush1.msra.mxu0 %v88
    %957 = vmatprep.subr.mxu0 0.0
    %958 = vmatpush1.msra.mxu0 %v89
    %959 = vmatprep.subr.mxu0 0.0
    %960 = vmatpush1.msra.mxu0 %v90
    %961 = vmatprep.subr.mxu0 0.0
    %962 = vmatpush1.msra.mxu0 %v91
    %963 = vmatprep.subr.mxu0 0.0
    %964 = vmatpush1.msra.mxu0 %v92
    %965 = vmatprep.subr.mxu0 0.0
    %966 = vmatpush1.msra.mxu0 %v93
    %967 = vmatprep.subr.mxu0 0.0
    %968 = vmatpush1.msra.mxu0 %v94
    %969 = vmatprep.subr.mxu0 0.0
    %970 = vmatpush1.msra.mxu0 %v95
    %971 = vmatprep.subr.mxu0 0.0
    %972 = vmatpush1.msra.mxu0 %v96
    %973 = vmatprep.subr.mxu0 0.0
    %974 = vmatpush1.msra.mxu0 %v97
    %975 = vmatprep.subr.mxu0 0.0
    %976 = vmatpush1.msra.mxu0 %v98
    %977 = vmatprep.subr.mxu0 0.0
    %978 = vmatpush1.msra.mxu0 %v99
    %979 = vmatprep.subr.mxu0 0.0
    %980 = vmatpush1.msra.mxu0 %v100
    %981 = vmatprep.subr.mxu0 0.0
    %982 = vmatpush1.msra.mxu0 0.0
    %983 = vmatprep.subr.mxu0 0.0
    %984 = vmatpush1.msra.mxu0 0.0
    %985 = vmatprep.subr.mxu0 0.0
    %986 = vmatpush1.msra.mxu0 0.0
    %987 = vmatprep.subr.mxu0 0.0
    %988 = vmatpush1.msra.mxu0 0.0
    %989 = vmatprep.subr.mxu0 0.0
    %990 = vmatpush1.msra.mxu0 0.0
    %991 = vmatprep.subr.mxu0 0.0
    %992 = vmatpush1.msra.mxu0 0.0
    %993 = vmatprep.subr.mxu0 0.0
    %994 = vmatpush1.msra.mxu0 0.0
    %995 = vmatprep.subr.mxu0 0.0
    %996 = vmatpush1.msra.mxu0 0.0
    %997 = vmatprep.subr.mxu0 0.0
    %998 = vmatpush1.msra.mxu0 0.0
    %999 = vmatprep.subr.mxu0 0.0
    %1000 = vmatpush1.msra.mxu0 0.0
    %1001 = vmatprep.subr.mxu0 0.0
    %1002 = vmatpush1.msra.mxu0 0.0
    %1003 = vmatprep.subr.mxu0 0.0
    %1004 = vmatpush1.msra.mxu0 0.0
    %1005 = vmatprep.subr.mxu0 0.0
    %1006 = vmatpush1.msra.mxu0 0.0
    %1007 = vmatprep.subr.mxu0 0.0
    %1008 = vmatpush1.msra.mxu0 0.0
    %1009 = vmatprep.subr.mxu0 0.0
    %1010 = vmatpush1.msra.mxu0 0.0
    %1011 = vmatprep.subr.mxu0 0.0
    %1012 = vmatpush1.msra.mxu0 0.0
    %1013 = vmatprep.mubr.f32.mxu0 0.0
    %1014 = vmatmul.mubr.f32.gmra.mrb[0].mxu0 %v877
    %v1015 = vpop.f32.mrb[0].mxu0
    %v1016 = vadd.f32 0.0, %v1015
    %v1017 = vpop.f32.mrb[0].mxu0
    %1018 = vdwg.mxu0
    %v1019 = vmul.f32 %v1016, 0.001953125
    %v1020 = vmul.f32 %v948, %v948
    %v1021 = vsub.f32 %v1019, %v1020
    %v1022 = vld [vmem:[%s6] sm:$0x1]
    %v1023 = vadd.f32 %v1021, 1e-05
    %v1024 = vrsqrt.pop %v1023
    %v1025 = vmul.f32 %v1022, %v1024
    %v1026 = vld [vmem:[%s7] sm:$0x1]
    %v1027 = vmul.f32 %v948, %v1025
    %v1028 = vsub.f32 %v1026, %v1027
    %v1030 = vlaneseq
    %v1031 = vshrl.u32 %v1030, 7
    %v1032 = vsub.s32 0, %v1031
    %v1033 = vrot.slane %v1025, %v1032
    %v1035 = vmul.f32 %v860, %v1033
    %v1036 = vmul.f32 %v861, %v1033
    %v1038 = vlaneseq
    %v1039 = vshrl.u32 %v1038, 7
    %v1040 = vsub.s32 0, %v1039
    %v1041 = vrot.slane %v1028, %v1040
    %v1043 = vadd.f32 %v1035, %v1041
    %v1044 = vadd.f32 %v1036, %v1041
    %v1045 = vadd.f32 %v101, %v1043
    %v1046 = vadd.f32 %v102, %v1044
    %1047 = vst [vmem:[#allocation12] sm:$0xff] %v1045
    %1048 = vst [vmem:[#allocation12 + $0x8] sm:$0xff] %v1046
    // Predicated region
    $region50: #{tpu_custom_call.1} parent=1 // pred_check
      _
    $region51: #{tpu_custom_call.1} parent=1 // pred_check_branch
      %1050 = sbr.rel (0) target = $region53
    $region52: #{tpu_custom_call.1} parent=1 // pred_region
      %s1052 = ssub.s32 256, 256
      %1053 = vsyncadd [#allocation6], %s1052
      %s1054 = sshll.u32 [#allocation12], 4
      %s1055 = int_to_ptr.vmem [resolvable:$true] %s1054
      %1060 = dma.vmem_to_hbm [thread:$0]  %s1055, 256, %s8, [#allocation6], 128, 128, 8
    $region53: #{tpu_custom_call.1} parent=1 // pred_fallthru
      _
    // Predicated region
    $region54: #{tpu_custom_call.1} parent=1 // pred_check
      _
    $region55: #{tpu_custom_call.1} parent=1 // pred_check_branch
      %1062 = sbr.rel (0) target = $region57
    $region56: #{tpu_custom_call.1} parent=1 // pred_region
      %1063 = dma.done [#allocation6], 256
    $region57: #{tpu_custom_call.1} parent=1 // pred_fallthru
      _
    %1064 = vsyncpa [#allocation5], 1
    %1065 = vsyncpa [#allocation8], 1
    %1066 = vsyncpa [#allocation11], 1
    %1067 = vsyncpa [#allocation6], 1

</llo_original>
